<compile_context>
chip_gen: v5e
topology: v5e:2x2
jax: 0.10.0
libtpu: 0.0.40
codegen_flags: <defaults>
</compile_context>

<pallas_src>
import math
from functools import partial

import jax
import jax.numpy as jnp
from jax.experimental import pallas as pl
from jax.experimental.pallas import tpu as pltpu

MAX_GQA_LENGTH = 20  # unused: language branch (string input) is not representable


# ---------------------------------------------------------------------------
# In-kernel math helpers (traced into the Pallas kernel body, all in f32)
# ---------------------------------------------------------------------------
def _erf(x):
    # Abramowitz & Stegun 7.1.26 rational approximation, |err| < 1.5e-7.
    # exp() goes to the EUP (separate bundle slot), the polynomial is cheap VPU work.
    a1, a2, a3, a4, a5 = 0.254829592, -0.284496736, 1.421413741, -1.453152027, 1.061405429
    p = 0.3275911
    sgn = jnp.where(x >= 0.0, 1.0, -1.0)
    ax = jnp.abs(x)
    t = 1.0 / (1.0 + p * ax)
    poly = ((((a5 * t + a4) * t + a3) * t + a2) * t + a1) * t
    return sgn * (1.0 - poly * jnp.exp(-ax * ax))


def _gelu(x):
    # GeLU exactly as in lxmert: x * 0.5 * (1 + erf(x / sqrt(2)))
    return x * 0.5 * (1.0 + _erf(x * (1.0 / math.sqrt(2.0))))


def _bert_layer_norm(x, gamma, beta, eps=1e-12):
    # BertLayerNorm: u = x - mean; s = mean(u^2); (u / sqrt(s + eps)) * gamma + beta
    mu = jnp.mean(x, axis=-1, keepdims=True)
    u = x - mu
    s = jnp.mean(u * u, axis=-1, keepdims=True)
    return u * jax.lax.rsqrt(s + eps) * gamma + beta


# ---------------------------------------------------------------------------
# Pallas kernel: one grid step processes TB batch elements end-to-end.
# ---------------------------------------------------------------------------
def gqa_kernel(feat_ref, pos_ref,
               wf_ref, bf_ref, gvf_ref, bvf_ref,
               wp_ref, bp_ref, gvp_ref, bvp_ref,
               wpool_ref, bpool_ref,
               w1_ref, b1_ref, g1_ref, be1_ref,
               w2_ref, b2_ref,
               out_ref, *, tb, num_obj):
    feat = feat_ref[...]                     # (TB*O, F) bf16
    pos = pos_ref[...]                       # (TB*O, 4) f32

    # --- simplified LXRT visual branch (VisualFeatEncoder-style) ------------
    # TODO(synk): full LXMERT language/cross-modality transformer layers and the
    # wordpiece tokenizer for `sent` are not representable in a Pallas kernel.
    vf = jnp.dot(feat, wf_ref[...], preferred_element_type=jnp.float32) + bf_ref[...]
    vf = _bert_layer_norm(vf, gvf_ref[...], bvf_ref[...])

    # pos projection has K=4: four VPU broadcast FMAs instead of an MXU matmul.
    wp = wp_ref[...]                         # (4, H) f32
    vp = (pos[:, 0:1] * wp[0:1, :]
          + pos[:, 1:2] * wp[1:2, :]
          + pos[:, 2:3] * wp[2:3, :]
          + pos[:, 3:4] * wp[3:4, :]
          + bp_ref[...])
    vp = _bert_layer_norm(vp, gvp_ref[...], bvp_ref[...])

    # Fused 0.5*(vf+vp) average + mean over objects:
    #   pooled = sum_over_O(vf + vp) * (0.5 / O)
    # One batched reduction for all TB examples; the scalar scale is applied on
    # the small (TB, H) result instead of the (TB*O, H) slab.
    v_sum = vf + vp                                              # (TB*O, H) f32
    h_dim = v_sum.shape[-1]
    pooled = jnp.sum(v_sum.reshape(tb, num_obj, h_dim), axis=1)  # (TB, H) f32
    pooled = pooled * (0.5 / num_obj)

    # BertPooler: Linear + tanh (tanh in f32 on the EUP).
    x = jnp.tanh(
        jnp.dot(pooled.astype(jnp.bfloat16), wpool_ref[...],
                preferred_element_type=jnp.float32) + bpool_ref[...])

    # --- logit_fc: Linear(H, 2H) -> GeLU -> BertLayerNorm(2H) -> Linear(2H, A_pad)
    h = jnp.dot(x.astype(jnp.bfloat16), w1_ref[...],
                preferred_element_type=jnp.float32) + b1_ref[...]
    h = _gelu(h)
    h = _bert_layer_norm(h, g1_ref[...], be1_ref[...])
    logit = jnp.dot(h.astype(jnp.bfloat16), w2_ref[...],
                    preferred_element_type=jnp.float32) + b2_ref[...]

    out_ref[...] = logit                     # (TB, A_pad) f32, lane-dense store


PARAM_ORDER = ("wf", "bf", "gvf", "bvf",
               "wp", "bp", "gvp", "bvp",
               "wpool", "bpool",
               "w1", "b1", "g1", "be1",
               "w2", "b2")


# ---------------------------------------------------------------------------
# Wrapper
# ---------------------------------------------------------------------------
def gqa_plain_model(feat, pos, params, *, tb=8):
    """feat: (B, O, F) f32, pos: (B, O, 4) f32 -> (B, num_answers) f32 logits.

    tb = batch rows per grid step.  On real hardware pick tb so tb*O (and tb for the
    head matmuls) is a multiple of 128 (v5e MXU) / 256 (v6e, v7x MXU).
    """
    B, O, F = feat.shape
    A = params["w2"].shape[1]

    nb = pl.cdiv(B, tb)
    b_pad = nb * tb
    a_pad = ((A + 127) // 128) * 128

    if b_pad != B:
        feat = jnp.concatenate(
            [feat, jnp.zeros((b_pad - B, O, F), feat.dtype)], axis=0)
        pos = jnp.concatenate(
            [pos, jnp.zeros((b_pad - B, O, 4), pos.dtype)], axis=0)

    # Flatten the batch into row slabs; bf16 for the MXU operand.
    feat2d = feat.reshape(b_pad * O, F).astype(jnp.bfloat16)
    pos2d = pos.reshape(b_pad * O, 4).astype(jnp.float32)

    # bf16 matmul weights; biases / LayerNorm params stay f32.
    p = dict(params)
    p["wf"] = params["wf"].astype(jnp.bfloat16)
    p["wpool"] = params["wpool"].astype(jnp.bfloat16)
    p["w1"] = params["w1"].astype(jnp.bfloat16)
    w2 = params["w2"]
    b2 = params["b2"]
    if a_pad != A:
        # Pad the answer dim to a multiple of 128 -> lane-dense, unmasked output
        # stores.  Padded columns are zero-weight / zero-bias and sliced off below.
        w2 = jnp.pad(w2, ((0, 0), (0, a_pad - A)))
        b2 = jnp.pad(b2, ((0, 0), (0, a_pad - A)))
    p["w2"] = w2.astype(jnp.bfloat16)
    p["b2"] = b2.astype(jnp.float32)

    def _const_spec(arr):
        # Constant block index: weight is DMA'd once and stays VMEM-resident
        # across the whole grid (block index never changes -> no re-fetch).
        shape = arr.shape
        return pl.BlockSpec(shape, lambda i: (0,) * len(shape))

    in_specs = [
        pl.BlockSpec((tb * O, F), lambda i: (i, 0)),   # feat rows for this tile
        pl.BlockSpec((tb * O, 4), lambda i: (i, 0)),   # pos rows for this tile
    ] + [_const_spec(p[k]) for k in PARAM_ORDER]

    out_specs = pl.BlockSpec((tb, a_pad), lambda i: (i, 0))

    out = pl.pallas_call(
        partial(gqa_kernel, tb=tb, num_obj=O),
        out_shape=jax.ShapeDtypeStruct((b_pad, a_pad), jnp.float32),
        grid_spec=pltpu.PrefetchScalarGridSpec(
            num_scalar_prefetch=0,
            grid=(nb,),
            in_specs=in_specs,
            out_specs=out_specs,
        ),
        compiler_params=pltpu.CompilerParams(
            dimension_semantics=("parallel",),          # batch tiles -> megacore
            vmem_limit_bytes=48 * 1024 * 1024,          # budget for real LXMERT weights
        ),
    )(feat2d, pos2d, *[p[k] for k in PARAM_ORDER])

    return out[:B, :A]


# ---------------------------------------------------------------------------
# Deterministic parameter init (mimics init_bert_weights: N(0, 0.02) weights,
# zero bias, LayerNorm gamma=1 / beta=0)
# ---------------------------------------------------------------------------
def init_params(key, feat_dim, hid_dim, num_answers):
    ks = jax.random.split(key, 5)
    n = lambda k, shape: (0.02 * jax.random.normal(k, shape)).astype(jnp.float32)
    H, H2 = hid_dim, 2 * hid_dim
    return {
        # visual-feature encoder (simplified LXRT)
        "wf": n(ks[0], (feat_dim, H)), "bf": jnp.zeros((1, H), jnp.float32),
        "gvf": jnp.ones((1, H), jnp.float32), "bvf": jnp.zeros((1, H), jnp.float32),
        "wp": n(ks[1], (4, H)), "bp": jnp.zeros((1, H), jnp.float32),
        "gvp": jnp.ones((1, H), jnp.float32), "bvp": jnp.zeros((1, H), jnp.float32),
        # pooler
        "wpool": n(ks[2], (H, H)), "bpool": jnp.zeros((1, H), jnp.float32),
        # logit_fc head
        "w1": n(ks[3], (H, H2)), "b1": jnp.zeros((1, H2), jnp.float32),
        "g1": jnp.ones((1, H2), jnp.float32), "be1": jnp.zeros((1, H2), jnp.float32),
        "w2": n(ks[4], (H2, num_answers)), "b2": jnp.zeros((1, num_answers), jnp.float32),
    }


# ---------------------------------------------------------------------------
# Pure-JAX reference with the same bf16 operand quantization (exact erf) so the
# comparison isolates kernel correctness rather than bf16 rounding.
# ---------------------------------------------------------------------------
def _ref_forward(feat, pos, p):
    bf16, f32 = jnp.bfloat16, jnp.float32

    def ln(x, g, b, eps=1e-12):
        mu = x.mean(-1, keepdims=True)
        u = x - mu
        s = (u * u).mean(-1, keepdims=True)
        return u * jax.lax.rsqrt(s + eps) * g + b

    vf = jnp.einsum("bof,fh->boh", feat.astype(bf16), p["wf"].astype(bf16),
                    preferred_element_type=f32) + p["bf"]
    vf = ln(vf, p["gvf"], p["bvf"])
    vp = jnp.einsum("boc,ch->boh", pos.astype(f32), p["wp"]) + p["bp"]
    vp = ln(vp, p["gvp"], p["bvp"])
    v = 0.5 * (vf + vp)
    pooled = v.mean(axis=1)
    x = jnp.tanh(jnp.dot(pooled.astype(bf16), p["wpool"].astype(bf16),
                         preferred_element_type=f32) + p["bpool"])
    h = jnp.dot(x.astype(bf16), p["w1"].astype(bf16),
                preferred_element_type=f32) + p["b1"]
    h = h * 0.5 * (1.0 + jax.scipy.special.erf(h / math.sqrt(2.0)))
    h = ln(h, p["g1"], p["be1"])
    return jnp.dot(h.astype(bf16), p["w2"].astype(bf16),
                   preferred_element_type=f32) + p["b2"]


if __name__ == "__main__":
    # batch, objects, visual feat dim, hid_dim, num_answers (small but lane-friendly)
    B, O, F, H, A = 16, 8, 128, 128, 16

    key = jax.random.PRNGKey(0)
    k_feat, k_pos, k_param = jax.random.split(key, 3)
    feat = jax.random.normal(k_feat, (B, O, F), jnp.float32)
    pos = jax.random.uniform(k_pos, (B, O, 4), jnp.float32)
    # sent: list of strings; tokenization has no Pallas equivalent (see TODO in kernel)
    sent = ["what color is the object on the left?"] * B

    params = init_params(k_param, F, H, A)

    logits = gqa_plain_model(feat, pos, params, tb=8)
    jax.block_until_ready(logits)

    ref = _ref_forward(feat, pos, params)
    assert logits.shape == (B, A), logits.shape
    max_err = float(jnp.max(jnp.abs(logits - ref)))
    assert jnp.allclose(logits, ref, atol=1e-2, rtol=1e-2), max_err

    print("KERNEL_OK")
</pallas_src>

<mosaic_0001>
module attributes {stable_mosaic.version = 11 : i64} {
  func.func @gqa_kernel(%arg0: i32, %arg1: memref<64x128xbf16, #tpu.memory_space<vmem>>, %arg2: memref<64x4xf32, #tpu.memory_space<vmem>>, %arg3: memref<128x128xbf16, #tpu.memory_space<vmem>>, %arg4: memref<1x128xf32, #tpu.memory_space<vmem>>, %arg5: memref<1x128xf32, #tpu.memory_space<vmem>>, %arg6: memref<1x128xf32, #tpu.memory_space<vmem>>, %arg7: memref<4x128xf32, #tpu.memory_space<vmem>>, %arg8: memref<1x128xf32, #tpu.memory_space<vmem>>, %arg9: memref<1x128xf32, #tpu.memory_space<vmem>>, %arg10: memref<1x128xf32, #tpu.memory_space<vmem>>, %arg11: memref<128x128xbf16, #tpu.memory_space<vmem>>, %arg12: memref<1x128xf32, #tpu.memory_space<vmem>>, %arg13: memref<128x256xbf16, #tpu.memory_space<vmem>>, %arg14: memref<1x256xf32, #tpu.memory_space<vmem>>, %arg15: memref<1x256xf32, #tpu.memory_space<vmem>>, %arg16: memref<1x256xf32, #tpu.memory_space<vmem>>, %arg17: memref<256x128xbf16, #tpu.memory_space<vmem>>, %arg18: memref<1x128xf32, #tpu.memory_space<vmem>>, %arg19: memref<8x128xf32, #tpu.memory_space<vmem>>) attributes {dimension_semantics = [#tpu.dimension_semantics<parallel>], iteration_bounds = array<i64: 2>, scalar_prefetch = 0 : i64, scratch_operands = 0 : i64, tpu.core_type = #tpu.core_type<tc>, window_params = [{transform_indices = @transform_0, window_bounds = array<i64: 64, 128>}, {transform_indices = @transform_1, window_bounds = array<i64: 64, 4>}, {pipeline_mode = #tpu.pipeline_mode<synchronous>, transform_indices = @transform_2, window_bounds = array<i64: 128, 128>}, {pipeline_mode = #tpu.pipeline_mode<synchronous>, transform_indices = @transform_3, window_bounds = array<i64: 1, 128>}, {pipeline_mode = #tpu.pipeline_mode<synchronous>, transform_indices = @transform_4, window_bounds = array<i64: 1, 128>}, {pipeline_mode = #tpu.pipeline_mode<synchronous>, transform_indices = @transform_5, window_bounds = array<i64: 1, 128>}, {pipeline_mode = #tpu.pipeline_mode<synchronous>, transform_indices = @transform_6, window_bounds = array<i64: 4, 128>}, {pipeline_mode = #tpu.pipeline_mode<synchronous>, transform_indices = @transform_7, window_bounds = array<i64: 1, 128>}, {pipeline_mode = #tpu.pipeline_mode<synchronous>, transform_indices = @transform_8, window_bounds = array<i64: 1, 128>}, {pipeline_mode = #tpu.pipeline_mode<synchronous>, transform_indices = @transform_9, window_bounds = array<i64: 1, 128>}, {pipeline_mode = #tpu.pipeline_mode<synchronous>, transform_indices = @transform_10, window_bounds = array<i64: 128, 128>}, {pipeline_mode = #tpu.pipeline_mode<synchronous>, transform_indices = @transform_11, window_bounds = array<i64: 1, 128>}, {pipeline_mode = #tpu.pipeline_mode<synchronous>, transform_indices = @transform_12, window_bounds = array<i64: 128, 256>}, {pipeline_mode = #tpu.pipeline_mode<synchronous>, transform_indices = @transform_13, window_bounds = array<i64: 1, 256>}, {pipeline_mode = #tpu.pipeline_mode<synchronous>, transform_indices = @transform_14, window_bounds = array<i64: 1, 256>}, {pipeline_mode = #tpu.pipeline_mode<synchronous>, transform_indices = @transform_15, window_bounds = array<i64: 1, 256>}, {pipeline_mode = #tpu.pipeline_mode<synchronous>, transform_indices = @transform_16, window_bounds = array<i64: 256, 128>}, {pipeline_mode = #tpu.pipeline_mode<synchronous>, transform_indices = @transform_17, window_bounds = array<i64: 1, 128>}, {transform_indices = @transform_18, window_bounds = array<i64: 8, 128>}]} {
    %c0 = arith.constant 0 : index
    %c0_0 = arith.constant 0 : index
    %0 = vector.load %arg1[%c0, %c0_0] : memref<64x128xbf16, #tpu.memory_space<vmem>>, vector<64x128xbf16>
    %c0_1 = arith.constant 0 : index
    %c0_2 = arith.constant 0 : index
    %1 = vector.load %arg2[%c0_1, %c0_2] : memref<64x4xf32, #tpu.memory_space<vmem>>, vector<64x4xf32>
    %c0_3 = arith.constant 0 : index
    %c0_4 = arith.constant 0 : index
    %2 = vector.load %arg3[%c0_3, %c0_4] : memref<128x128xbf16, #tpu.memory_space<vmem>>, vector<128x128xbf16>
    %cst = arith.constant dense<0.000000e+00> : vector<64x128xf32>
    %3 = tpu.matmul %0, %2, %cst {dimension_numbers = #tpu.dot_dimension_numbers<[1], [0], [0], [1], [0, 0, 1, 1], [], []>} : vector<64x128xbf16>, vector<128x128xbf16>, vector<64x128xf32> -> vector<64x128xf32>
    %c0_5 = arith.constant 0 : index
    %c0_6 = arith.constant 0 : index
    %4 = vector.load %arg4[%c0_5, %c0_6] : memref<1x128xf32, #tpu.memory_space<vmem>>, vector<1x128xf32>
    %5 = vector.broadcast %4 : vector<1x128xf32> to vector<64x128xf32>
    %6 = arith.addf %3, %5 : vector<64x128xf32>
    %c0_7 = arith.constant 0 : index
    %c0_8 = arith.constant 0 : index
    %7 = vector.load %arg5[%c0_7, %c0_8] : memref<1x128xf32, #tpu.memory_space<vmem>>, vector<1x128xf32>
    %c0_9 = arith.constant 0 : index
    %c0_10 = arith.constant 0 : index
    %8 = vector.load %arg6[%c0_9, %c0_10] : memref<1x128xf32, #tpu.memory_space<vmem>>, vector<1x128xf32>
    %cst_11 = arith.constant dense<0.000000e+00> : vector<64xf32>
    %9 = vector.multi_reduction <add>, %6, %cst_11 [1] : vector<64x128xf32> to vector<64xf32>
    %10 = vector.shape_cast %9 : vector<64xf32> to vector<64x1xf32>
    %cst_12 = arith.constant 1.280000e+02 : f32
    %11 = vector.broadcast %cst_12 : f32 to vector<64x1xf32>
    %12 = arith.divf %10, %11 : vector<64x1xf32>
    %13 = vector.broadcast %12 : vector<64x1xf32> to vector<64x128xf32>
    %14 = arith.subf %6, %13 : vector<64x128xf32>
    %15 = arith.mulf %14, %14 : vector<64x128xf32>
    %cst_13 = arith.constant dense<0.000000e+00> : vector<64xf32>
    %16 = vector.multi_reduction <add>, %15, %cst_13 [1] : vector<64x128xf32> to vector<64xf32>
    %17 = vector.shape_cast %16 : vector<64xf32> to vector<64x1xf32>
    %cst_14 = arith.constant 1.280000e+02 : f32
    %18 = vector.broadcast %cst_14 : f32 to vector<64x1xf32>
    %19 = arith.divf %17, %18 : vector<64x1xf32>
    %cst_15 = arith.constant 9.99999996E-13 : f32
    %20 = vector.broadcast %cst_15 : f32 to vector<64x1xf32>
    %21 = arith.addf %19, %20 : vector<64x1xf32>
    %22 = math.rsqrt %21 : vector<64x1xf32>
    %23 = vector.broadcast %22 : vector<64x1xf32> to vector<64x128xf32>
    %24 = arith.mulf %14, %23 : vector<64x128xf32>
    %25 = vector.broadcast %7 : vector<1x128xf32> to vector<64x128xf32>
    %26 = arith.mulf %24, %25 : vector<64x128xf32>
    %27 = vector.broadcast %8 : vector<1x128xf32> to vector<64x128xf32>
    %28 = arith.addf %26, %27 : vector<64x128xf32>
    %c0_16 = arith.constant 0 : index
    %c0_17 = arith.constant 0 : index
    %29 = vector.load %arg7[%c0_16, %c0_17] : memref<4x128xf32, #tpu.memory_space<vmem>>, vector<4x128xf32>
    %30 = vector.extract_strided_slice %1 {offsets = [0, 0], sizes = [64, 1], strides = [1, 1]} : vector<64x4xf32> to vector<64x1xf32>
    %31 = vector.extract_strided_slice %29 {offsets = [0, 0], sizes = [1, 128], strides = [1, 1]} : vector<4x128xf32> to vector<1x128xf32>
    %32 = vector.broadcast %30 : vector<64x1xf32> to vector<64x128xf32>
    %33 = vector.broadcast %31 : vector<1x128xf32> to vector<64x128xf32>
    %34 = arith.mulf %32, %33 : vector<64x128xf32>
    %35 = vector.extract_strided_slice %1 {offsets = [0, 1], sizes = [64, 1], strides = [1, 1]} : vector<64x4xf32> to vector<64x1xf32>
    %36 = vector.extract_strided_slice %29 {offsets = [1, 0], sizes = [1, 128], strides = [1, 1]} : vector<4x128xf32> to vector<1x128xf32>
    %37 = vector.broadcast %35 : vector<64x1xf32> to vector<64x128xf32>
    %38 = vector.broadcast %36 : vector<1x128xf32> to vector<64x128xf32>
    %39 = arith.mulf %37, %38 : vector<64x128xf32>
    %40 = arith.addf %34, %39 : vector<64x128xf32>
    %41 = vector.extract_strided_slice %1 {offsets = [0, 2], sizes = [64, 1], strides = [1, 1]} : vector<64x4xf32> to vector<64x1xf32>
    %42 = vector.extract_strided_slice %29 {offsets = [2, 0], sizes = [1, 128], strides = [1, 1]} : vector<4x128xf32> to vector<1x128xf32>
    %43 = vector.broadcast %41 : vector<64x1xf32> to vector<64x128xf32>
    %44 = vector.broadcast %42 : vector<1x128xf32> to vector<64x128xf32>
    %45 = arith.mulf %43, %44 : vector<64x128xf32>
    %46 = arith.addf %40, %45 : vector<64x128xf32>
    %47 = vector.extract_strided_slice %1 {offsets = [0, 3], sizes = [64, 1], strides = [1, 1]} : vector<64x4xf32> to vector<64x1xf32>
    %48 = vector.extract_strided_slice %29 {offsets = [3, 0], sizes = [1, 128], strides = [1, 1]} : vector<4x128xf32> to vector<1x128xf32>
    %49 = vector.broadcast %47 : vector<64x1xf32> to vector<64x128xf32>
    %50 = vector.broadcast %48 : vector<1x128xf32> to vector<64x128xf32>
    %51 = arith.mulf %49, %50 : vector<64x128xf32>
    %52 = arith.addf %46, %51 : vector<64x128xf32>
    %c0_18 = arith.constant 0 : index
    %c0_19 = arith.constant 0 : index
    %53 = vector.load %arg8[%c0_18, %c0_19] : memref<1x128xf32, #tpu.memory_space<vmem>>, vector<1x128xf32>
    %54 = vector.broadcast %53 : vector<1x128xf32> to vector<64x128xf32>
    %55 = arith.addf %52, %54 : vector<64x128xf32>
    %c0_20 = arith.constant 0 : index
    %c0_21 = arith.constant 0 : index
    %56 = vector.load %arg9[%c0_20, %c0_21] : memref<1x128xf32, #tpu.memory_space<vmem>>, vector<1x128xf32>
    %c0_22 = arith.constant 0 : index
    %c0_23 = arith.constant 0 : index
    %57 = vector.load %arg10[%c0_22, %c0_23] : memref<1x128xf32, #tpu.memory_space<vmem>>, vector<1x128xf32>
    %cst_24 = arith.constant dense<0.000000e+00> : vector<64xf32>
    %58 = vector.multi_reduction <add>, %55, %cst_24 [1] : vector<64x128xf32> to vector<64xf32>
    %59 = vector.shape_cast %58 : vector<64xf32> to vector<64x1xf32>
    %cst_25 = arith.constant 1.280000e+02 : f32
    %60 = vector.broadcast %cst_25 : f32 to vector<64x1xf32>
    %61 = arith.divf %59, %60 : vector<64x1xf32>
    %62 = vector.broadcast %61 : vector<64x1xf32> to vector<64x128xf32>
    %63 = arith.subf %55, %62 : vector<64x128xf32>
    %64 = arith.mulf %63, %63 : vector<64x128xf32>
    %cst_26 = arith.constant dense<0.000000e+00> : vector<64xf32>
    %65 = vector.multi_reduction <add>, %64, %cst_26 [1] : vector<64x128xf32> to vector<64xf32>
    %66 = vector.shape_cast %65 : vector<64xf32> to vector<64x1xf32>
    %cst_27 = arith.constant 1.280000e+02 : f32
    %67 = vector.broadcast %cst_27 : f32 to vector<64x1xf32>
    %68 = arith.divf %66, %67 : vector<64x1xf32>
    %cst_28 = arith.constant 9.99999996E-13 : f32
    %69 = vector.broadcast %cst_28 : f32 to vector<64x1xf32>
    %70 = arith.addf %68, %69 : vector<64x1xf32>
    %71 = math.rsqrt %70 : vector<64x1xf32>
    %72 = vector.broadcast %71 : vector<64x1xf32> to vector<64x128xf32>
    %73 = arith.mulf %63, %72 : vector<64x128xf32>
    %74 = vector.broadcast %56 : vector<1x128xf32> to vector<64x128xf32>
    %75 = arith.mulf %73, %74 : vector<64x128xf32>
    %76 = vector.broadcast %57 : vector<1x128xf32> to vector<64x128xf32>
    %77 = arith.addf %75, %76 : vector<64x128xf32>
    %78 = arith.addf %28, %77 : vector<64x128xf32>
    %79 = vector.shape_cast %78 : vector<64x128xf32> to vector<8x8x128xf32>
    %cst_29 = arith.constant dense<0.000000e+00> : vector<8x128xf32>
    %80 = vector.multi_reduction <add>, %79, %cst_29 [1] : vector<8x8x128xf32> to vector<8x128xf32>
    %cst_30 = arith.constant 6.250000e-02 : f32
    %81 = vector.broadcast %cst_30 : f32 to vector<8x128xf32>
    %82 = arith.mulf %80, %81 : vector<8x128xf32>
    %83 = arith.truncf %82 : vector<8x128xf32> to vector<8x128xbf16>
    %c0_31 = arith.constant 0 : index
    %c0_32 = arith.constant 0 : index
    %84 = vector.load %arg11[%c0_31, %c0_32] : memref<128x128xbf16, #tpu.memory_space<vmem>>, vector<128x128xbf16>
    %cst_33 = arith.constant dense<0.000000e+00> : vector<8x128xf32>
    %85 = tpu.matmul %83, %84, %cst_33 {dimension_numbers = #tpu.dot_dimension_numbers<[1], [0], [0], [1], [0, 0, 1, 1], [], []>} : vector<8x128xbf16>, vector<128x128xbf16>, vector<8x128xf32> -> vector<8x128xf32>
    %c0_34 = arith.constant 0 : index
    %c0_35 = arith.constant 0 : index
    %86 = vector.load %arg12[%c0_34, %c0_35] : memref<1x128xf32, #tpu.memory_space<vmem>>, vector<1x128xf32>
    %87 = vector.broadcast %86 : vector<1x128xf32> to vector<8x128xf32>
    %88 = arith.addf %85, %87 : vector<8x128xf32>
    %89 = math.tanh %88 : vector<8x128xf32>
    %90 = arith.truncf %89 : vector<8x128xf32> to vector<8x128xbf16>
    %c0_36 = arith.constant 0 : index
    %c0_37 = arith.constant 0 : index
    %91 = vector.load %arg13[%c0_36, %c0_37] : memref<128x256xbf16, #tpu.memory_space<vmem>>, vector<128x256xbf16>
    %cst_38 = arith.constant dense<0.000000e+00> : vector<8x256xf32>
    %92 = tpu.matmul %90, %91, %cst_38 {dimension_numbers = #tpu.dot_dimension_numbers<[1], [0], [0], [1], [0, 0, 1, 1], [], []>} : vector<8x128xbf16>, vector<128x256xbf16>, vector<8x256xf32> -> vector<8x256xf32>
    %c0_39 = arith.constant 0 : index
    %c0_40 = arith.constant 0 : index
    %93 = vector.load %arg14[%c0_39, %c0_40] : memref<1x256xf32, #tpu.memory_space<vmem>>, vector<1x256xf32>
    %94 = vector.broadcast %93 : vector<1x256xf32> to vector<8x256xf32>
    %95 = arith.addf %92, %94 : vector<8x256xf32>
    %cst_41 = arith.constant 5.000000e-01 : f32
    %96 = vector.broadcast %cst_41 : f32 to vector<8x256xf32>
    %97 = arith.mulf %95, %96 : vector<8x256xf32>
    %cst_42 = arith.constant 0.707106769 : f32
    %98 = vector.broadcast %cst_42 : f32 to vector<8x256xf32>
    %99 = arith.mulf %95, %98 : vector<8x256xf32>
    %cst_43 = arith.constant 0.000000e+00 : f32
    %100 = vector.broadcast %cst_43 : f32 to vector<8x256xf32>
    %101 = arith.cmpf oge, %99, %100 : vector<8x256xf32>
    %cst_44 = arith.constant 1.000000e+00 : f32
    %cst_45 = arith.constant -1.000000e+00 : f32
    %102 = vector.broadcast %cst_44 : f32 to vector<8x256xf32>
    %103 = vector.broadcast %cst_45 : f32 to vector<8x256xf32>
    %104 = arith.select %101, %102, %103 : vector<8x256xi1>, vector<8x256xf32>
    %105 = math.absf %99 : vector<8x256xf32>
    %cst_46 = arith.constant 0.327591091 : f32
    %106 = vector.broadcast %cst_46 : f32 to vector<8x256xf32>
    %107 = arith.mulf %106, %105 : vector<8x256xf32>
    %cst_47 = arith.constant 1.000000e+00 : f32
    %108 = vector.broadcast %cst_47 : f32 to vector<8x256xf32>
    %109 = arith.addf %108, %107 : vector<8x256xf32>
    %cst_48 = arith.constant 1.000000e+00 : f32
    %110 = vector.broadcast %cst_48 : f32 to vector<8x256xf32>
    %111 = arith.divf %110, %109 : vector<8x256xf32>
    %cst_49 = arith.constant 1.06140542 : f32
    %112 = vector.broadcast %cst_49 : f32 to vector<8x256xf32>
    %113 = arith.mulf %112, %111 : vector<8x256xf32>
    %cst_50 = arith.constant -1.45315206 : f32
    %114 = vector.broadcast %cst_50 : f32 to vector<8x256xf32>
    %115 = arith.addf %113, %114 : vector<8x256xf32>
    %116 = arith.mulf %115, %111 : vector<8x256xf32>
    %cst_51 = arith.constant 1.42141378 : f32
    %117 = vector.broadcast %cst_51 : f32 to vector<8x256xf32>
    %118 = arith.addf %116, %117 : vector<8x256xf32>
    %119 = arith.mulf %118, %111 : vector<8x256xf32>
    %cst_52 = arith.constant -0.284496725 : f32
    %120 = vector.broadcast %cst_52 : f32 to vector<8x256xf32>
    %121 = arith.addf %119, %120 : vector<8x256xf32>
    %122 = arith.mulf %121, %111 : vector<8x256xf32>
    %cst_53 = arith.constant 0.254829586 : f32
    %123 = vector.broadcast %cst_53 : f32 to vector<8x256xf32>
    %124 = arith.addf %122, %123 : vector<8x256xf32>
    %125 = arith.mulf %124, %111 : vector<8x256xf32>
    %cst_54 = arith.constant 0.000000e+00 : f32
    %126 = vector.broadcast %cst_54 : f32 to vector<8x256xf32>
    %127 = arith.subf %126, %105 : vector<8x256xf32>
    %128 = arith.mulf %127, %105 : vector<8x256xf32>
    %129 = math.exp %128 : vector<8x256xf32>
    %130 = arith.mulf %125, %129 : vector<8x256xf32>
    %cst_55 = arith.constant 1.000000e+00 : f32
    %131 = vector.broadcast %cst_55 : f32 to vector<8x256xf32>
    %132 = arith.subf %131, %130 : vector<8x256xf32>
    %133 = arith.mulf %104, %132 : vector<8x256xf32>
    %cst_56 = arith.constant 1.000000e+00 : f32
    %134 = vector.broadcast %cst_56 : f32 to vector<8x256xf32>
    %135 = arith.addf %134, %133 : vector<8x256xf32>
    %136 = arith.mulf %97, %135 : vector<8x256xf32>
    %c0_57 = arith.constant 0 : index
    %c0_58 = arith.constant 0 : index
    %137 = vector.load %arg15[%c0_57, %c0_58] : memref<1x256xf32, #tpu.memory_space<vmem>>, vector<1x256xf32>
    %c0_59 = arith.constant 0 : index
    %c0_60 = arith.constant 0 : index
    %138 = vector.load %arg16[%c0_59, %c0_60] : memref<1x256xf32, #tpu.memory_space<vmem>>, vector<1x256xf32>
    %cst_61 = arith.constant dense<0.000000e+00> : vector<8xf32>
    %139 = vector.multi_reduction <add>, %136, %cst_61 [1] : vector<8x256xf32> to vector<8xf32>
    %140 = vector.shape_cast %139 : vector<8xf32> to vector<8x1xf32>
    %cst_62 = arith.constant 2.560000e+02 : f32
    %141 = vector.broadcast %cst_62 : f32 to vector<8x1xf32>
    %142 = arith.divf %140, %141 : vector<8x1xf32>
    %143 = vector.broadcast %142 : vector<8x1xf32> to vector<8x256xf32>
    %144 = arith.subf %136, %143 : vector<8x256xf32>
    %145 = arith.mulf %144, %144 : vector<8x256xf32>
    %cst_63 = arith.constant dense<0.000000e+00> : vector<8xf32>
    %146 = vector.multi_reduction <add>, %145, %cst_63 [1] : vector<8x256xf32> to vector<8xf32>
    %147 = vector.shape_cast %146 : vector<8xf32> to vector<8x1xf32>
    %cst_64 = arith.constant 2.560000e+02 : f32
    %148 = vector.broadcast %cst_64 : f32 to vector<8x1xf32>
    %149 = arith.divf %147, %148 : vector<8x1xf32>
    %cst_65 = arith.constant 9.99999996E-13 : f32
    %150 = vector.broadcast %cst_65 : f32 to vector<8x1xf32>
    %151 = arith.addf %149, %150 : vector<8x1xf32>
    %152 = math.rsqrt %151 : vector<8x1xf32>
    %153 = vector.broadcast %152 : vector<8x1xf32> to vector<8x256xf32>
    %154 = arith.mulf %144, %153 : vector<8x256xf32>
    %155 = vector.broadcast %137 : vector<1x256xf32> to vector<8x256xf32>
    %156 = arith.mulf %154, %155 : vector<8x256xf32>
    %157 = vector.broadcast %138 : vector<1x256xf32> to vector<8x256xf32>
    %158 = arith.addf %156, %157 : vector<8x256xf32>
    %159 = arith.truncf %158 : vector<8x256xf32> to vector<8x256xbf16>
    %c0_66 = arith.constant 0 : index
    %c0_67 = arith.constant 0 : index
    %160 = vector.load %arg17[%c0_66, %c0_67] : memref<256x128xbf16, #tpu.memory_space<vmem>>, vector<256x128xbf16>
    %cst_68 = arith.constant dense<0.000000e+00> : vector<8x128xf32>
    %161 = tpu.matmul %159, %160, %cst_68 {dimension_numbers = #tpu.dot_dimension_numbers<[1], [0], [0], [1], [0, 0, 1, 1], [], []>} : vector<8x256xbf16>, vector<256x128xbf16>, vector<8x128xf32> -> vector<8x128xf32>
    %c0_69 = arith.constant 0 : index
    %c0_70 = arith.constant 0 : index
    %162 = vector.load %arg18[%c0_69, %c0_70] : memref<1x128xf32, #tpu.memory_space<vmem>>, vector<1x128xf32>
    %163 = vector.broadcast %162 : vector<1x128xf32> to vector<8x128xf32>
    %164 = arith.addf %161, %163 : vector<8x128xf32>
    %c0_71 = arith.constant 0 : index
    %c0_72 = arith.constant 0 : index
    %165 = vector.load %arg19[%c0_71, %c0_72] : memref<8x128xf32, #tpu.memory_space<vmem>>, vector<8x128xf32>
    tpu.vector_store %arg19[%c0_71, %c0_72], %164 {strides = array<i32>} : memref<8x128xf32, #tpu.memory_space<vmem>>, vector<8x128xf32>,
    return
  }
  func.func @transform_0(%arg0: i32) -> (i32, i32) {
    %c0_i32 = arith.constant 0 : i32
    %c0_i32_0 = arith.constant 0 : i32
    return %arg0, %c0_i32 : i32, i32
  }
  func.func @transform_1(%arg0: i32) -> (i32, i32) {
    %c0_i32 = arith.constant 0 : i32
    %c0_i32_0 = arith.constant 0 : i32
    return %arg0, %c0_i32 : i32, i32
  }
  func.func @transform_2(%arg0: i32) -> (i32, i32) {
    %c0_i32 = arith.constant 0 : i32
    %c0_i32_0 = arith.constant 0 : i32
    %c0_i32_1 = arith.constant 0 : i32
    return %c0_i32, %c0_i32_0 : i32, i32
  }
  func.func @transform_3(%arg0: i32) -> (i32, i32) {
    %c0_i32 = arith.constant 0 : i32
    %c0_i32_0 = arith.constant 0 : i32
    %c0_i32_1 = arith.constant 0 : i32
    return %c0_i32, %c0_i32_0 : i32, i32
  }
  func.func @transform_4(%arg0: i32) -> (i32, i32) {
    %c0_i32 = arith.constant 0 : i32
    %c0_i32_0 = arith.constant 0 : i32
    %c0_i32_1 = arith.constant 0 : i32
    return %c0_i32, %c0_i32_0 : i32, i32
  }
  func.func @transform_5(%arg0: i32) -> (i32, i32) {
    %c0_i32 = arith.constant 0 : i32
    %c0_i32_0 = arith.constant 0 : i32
    %c0_i32_1 = arith.constant 0 : i32
    return %c0_i32, %c0_i32_0 : i32, i32
  }
  func.func @transform_6(%arg0: i32) -> (i32, i32) {
    %c0_i32 = arith.constant 0 : i32
    %c0_i32_0 = arith.constant 0 : i32
    %c0_i32_1 = arith.constant 0 : i32
    return %c0_i32, %c0_i32_0 : i32, i32
  }
  func.func @transform_7(%arg0: i32) -> (i32, i32) {
    %c0_i32 = arith.constant 0 : i32
    %c0_i32_0 = arith.constant 0 : i32
    %c0_i32_1 = arith.constant 0 : i32
    return %c0_i32, %c0_i32_0 : i32, i32
  }
  func.func @transform_8(%arg0: i32) -> (i32, i32) {
    %c0_i32 = arith.constant 0 : i32
    %c0_i32_0 = arith.constant 0 : i32
    %c0_i32_1 = arith.constant 0 : i32
    return %c0_i32, %c0_i32_0 : i32, i32
  }
  func.func @transform_9(%arg0: i32) -> (i32, i32) {
    %c0_i32 = arith.constant 0 : i32
    %c0_i32_0 = arith.constant 0 : i32
    %c0_i32_1 = arith.constant 0 : i32
    return %c0_i32, %c0_i32_0 : i32, i32
  }
  func.func @transform_10(%arg0: i32) -> (i32, i32) {
    %c0_i32 = arith.constant 0 : i32
    %c0_i32_0 = arith.constant 0 : i32
    %c0_i32_1 = arith.constant 0 : i32
    return %c0_i32, %c0_i32_0 : i32, i32
  }
  func.func @transform_11(%arg0: i32) -> (i32, i32) {
    %c0_i32 = arith.constant 0 : i32
    %c0_i32_0 = arith.constant 0 : i32
    %c0_i32_1 = arith.constant 0 : i32
    return %c0_i32, %c0_i32_0 : i32, i32
  }
  func.func @transform_12(%arg0: i32) -> (i32, i32) {
    %c0_i32 = arith.constant 0 : i32
    %c0_i32_0 = arith.constant 0 : i32
    %c0_i32_1 = arith.constant 0 : i32
    return %c0_i32, %c0_i32_0 : i32, i32
  }
  func.func @transform_13(%arg0: i32) -> (i32, i32) {
    %c0_i32 = arith.constant 0 : i32
    %c0_i32_0 = arith.constant 0 : i32
    %c0_i32_1 = arith.constant 0 : i32
    return %c0_i32, %c0_i32_0 : i32, i32
  }
  func.func @transform_14(%arg0: i32) -> (i32, i32) {
    %c0_i32 = arith.constant 0 : i32
    %c0_i32_0 = arith.constant 0 : i32
    %c0_i32_1 = arith.constant 0 : i32
    return %c0_i32, %c0_i32_0 : i32, i32
  }
  func.func @transform_15(%arg0: i32) -> (i32, i32) {
    %c0_i32 = arith.constant 0 : i32
    %c0_i32_0 = arith.constant 0 : i32
    %c0_i32_1 = arith.constant 0 : i32
    return %c0_i32, %c0_i32_0 : i32, i32
  }
  func.func @transform_16(%arg0: i32) -> (i32, i32) {
    %c0_i32 = arith.constant 0 : i32
    %c0_i32_0 = arith.constant 0 : i32
    %c0_i32_1 = arith.constant 0 : i32
    return %c0_i32, %c0_i32_0 : i32, i32
  }
  func.func @transform_17(%arg0: i32) -> (i32, i32) {
    %c0_i32 = arith.constant 0 : i32
    %c0_i32_0 = arith.constant 0 : i32
    %c0_i32_1 = arith.constant 0 : i32
    return %c0_i32, %c0_i32_0 : i32, i32
  }
  func.func @transform_18(%arg0: i32) -> (i32, i32) {
    %c0_i32 = arith.constant 0 : i32
    %c0_i32_0 = arith.constant 0 : i32
    return %arg0, %c0_i32 : i32, i32
  }
}

</mosaic_0001>

<llo_original>
// kernel: tpu_custom_call.1
$region0: #{tpu_custom_call.1}
  #allocation0 [shape = 'u32[]', space=smem, size = 0x4, offset = 0x4, fixed_abs, tag = 'smem constant byte address 0x4 - core index']
  #allocation1 [shape = 'u32[72,128]{1,0:T(1,128)}', space=vmem, size = 0x9000, scoped, tag = 'internal scratch']
  %s0 = inlined_call_operand.hbm [shape: bf16[128,128], index: 0, kind: input, shape index: {}]
  %s1 = inlined_call_operand.vmem [shape: f32[128,4], index: 1, kind: input, shape index: {}]
  %s2 = inlined_call_operand.hbm [shape: bf16[128,128], index: 2, kind: input, shape index: {}]
  %s3 = inlined_call_operand.vmem [shape: f32[1,128], index: 3, kind: input, shape index: {}]
  %s4 = inlined_call_operand.vmem [shape: f32[1,128], index: 4, kind: input, shape index: {}]
  %s5 = inlined_call_operand.vmem [shape: f32[1,128], index: 5, kind: input, shape index: {}]
  %s6 = inlined_call_operand.vmem [shape: f32[4,128], index: 6, kind: input, shape index: {}]
  %s7 = inlined_call_operand.vmem [shape: f32[1,128], index: 7, kind: input, shape index: {}]
  %s8 = inlined_call_operand.vmem [shape: f32[1,128], index: 8, kind: input, shape index: {}]
  %s9 = inlined_call_operand.hbm [shape: f32[1,128], index: 9, kind: input, shape index: {}]
  %s10 = inlined_call_operand.hbm [shape: bf16[128,128], index: 10, kind: input, shape index: {}]
  %s11 = inlined_call_operand.hbm [shape: f32[1,128], index: 11, kind: input, shape index: {}]
  %s12 = inlined_call_operand.vmem [shape: bf16[128,256], index: 12, kind: input, shape index: {}]
  %s13 = inlined_call_operand.vmem [shape: f32[1,256], index: 13, kind: input, shape index: {}]
  %s14 = inlined_call_operand.vmem [shape: f32[1,256], index: 14, kind: input, shape index: {}]
  %s15 = inlined_call_operand.vmem [shape: f32[1,256], index: 15, kind: input, shape index: {}]
  %s16 = inlined_call_operand.hbm [shape: bf16[256,128], index: 16, kind: input, shape index: {}]
  %s17 = inlined_call_operand.vmem [shape: f32[1,128], index: 17, kind: input, shape index: {}]
  %s18 = inlined_call_operand.hbm [shape: f32[16,128], index: 18, kind: output, shape index: {}]
  %s19 = sld [smem:[#allocation0]]
  $region129: #{tpu_custom_call.1} parent=0
    _
  %s21 = ssub.s32 1, %s19
  %s22 = scalar_select 0, %s21, %s19
  $region1: #{tpu_custom_call.1} parent=0
    #allocation2 [shape = 'u8[32768]{0}', space=vmem, size = 0x8000, scoped, tag = 'input window, operand 0']
    #allocation3 [shape = 's32[2]{0}', space=sflag, size = 0x8, scoped, tag = 'scoped memory for tpu_custom_call.1']
    #allocation4 [shape = 's32[2]{0}', space=sflag, size = 0x8, scoped, tag = 'scoped memory for tpu_custom_call.1']
    #allocation5 [shape = 'u8[32768]{0}', space=vmem, size = 0x8000, scoped, tag = 'input window, operand 2, single buffered']
    #allocation6 [shape = 's32[1]{0}', space=sflag, size = 0x4, scoped, tag = 'scoped memory for tpu_custom_call.1']
    #allocation7 [shape = 'u8[512]{0}', space=vmem, size = 0x400, scoped, tag = 'input window, operand 9, single buffered']
    #allocation8 [shape = 'u8[32768]{0}', space=vmem, size = 0x8000, scoped, tag = 'input window, operand 10, single buffered']
    #allocation9 [shape = 's32[1]{0}', space=sflag, size = 0x4, scoped, tag = 'scoped memory for tpu_custom_call.1']
    #allocation10 [shape = 'u8[512]{0}', space=vmem, size = 0x400, scoped, tag = 'input window, operand 11, single buffered']
    #allocation11 [shape = 'u8[65536]{0}', space=vmem, size = 0x10000, scoped, tag = 'input window, operand 16, single buffered']
    #allocation12 [shape = 's32[1]{0}', space=sflag, size = 0x4, scoped, tag = 'scoped memory for tpu_custom_call.1']
    #allocation13 [shape = 'u8[8192]{0}', space=vmem, size = 0x2000, scoped, tag = 'output window, operand 0']
    %23 = vsyncpa [#allocation3], 0
    %s24 = scalar_lea.sflag [#allocation3], 1
    %25 = vsyncpa %s24, 0
    %26 = vsyncpa [#allocation6], 0
    %27 = vsyncpa [#allocation9], 0
    %28 = vsyncpa [#allocation12], 0
    %29 = vsyncpa [#allocation4], 0
    %s30 = scalar_lea.sflag [#allocation4], 1
    %31 = vsyncpa %s30, 0
    loop: start=0, step=1, limit=4
    $region2: #{tpu_custom_call.1} parent=1 // loop_pre_header
      _
    $region3: #{tpu_custom_call.1} parent=1 // loop_header
      %s33 = sphi 0, %s37
      %p34 = scmp.ge.s32.totalorder %s33, 4
      %s43 = sphi 0, %s45
      %s46 = sphi 0, %s43
      %s47 = sphi 0, %s46
      %s63 = sphi 0, %s47
      %s69 = sphi 0, %s71
      %s72 = sphi 0, %s69
      %s73 = sphi 0, %s72
      %s89 = sphi 0, %s73
      %s93 = sphi 0, %s93
      %s95 = sphi 0, %s93
      %s96 = sphi 0, %s95
      %s110 = sphi 0, %s96
      %s114 = sphi 0, %s114
      %s116 = sphi 0, %s114
      %s117 = sphi 0, %s116
      %s131 = sphi 0, %s117
      %s135 = sphi 0, %s135
      %s137 = sphi 0, %s135
      %s138 = sphi 0, %s137
      %s152 = sphi 0, %s138
      %s156 = sphi 0, %s156
      %s158 = sphi 0, %s156
      %s159 = sphi 0, %s158
      %s173 = sphi 0, %s159
      %s177 = sphi 0, %s177
      %s179 = sphi 0, %s177
      %s180 = sphi 0, %s179
      %s194 = sphi 0, %s180
      %s198 = sphi 0, %s198
      %s200 = sphi 0, %s198
      %s201 = sphi 0, %s200
      %s215 = sphi 0, %s201
      %s219 = sphi 0, %s219
      %s221 = sphi 0, %s219
      %s222 = sphi 0, %s221
      %s236 = sphi 0, %s222
      %s240 = sphi 0, %s240
      %s242 = sphi 0, %s240
      %s243 = sphi 0, %s242
      %s257 = sphi 0, %s243
      %s261 = sphi 0, %s261
      %s263 = sphi 0, %s261
      %s264 = sphi 0, %s263
      %s278 = sphi 0, %s264
      %s282 = sphi 0, %s282
      %s284 = sphi 0, %s282
      %s285 = sphi 0, %s284
      %s299 = sphi 0, %s285
      %s303 = sphi 0, %s303
      %s305 = sphi 0, %s303
      %s306 = sphi 0, %s305
      %s320 = sphi 0, %s306
      %s324 = sphi 0, %s324
      %s326 = sphi 0, %s324
      %s327 = sphi 0, %s326
      %s341 = sphi 0, %s327
      %s345 = sphi 0, %s345
      %s347 = sphi 0, %s345
      %s348 = sphi 0, %s347
      %s362 = sphi 0, %s348
      %s366 = sphi 0, %s366
      %s368 = sphi 0, %s366
      %s369 = sphi 0, %s368
      %s383 = sphi 0, %s369
      %s387 = sphi 0, %s387
      %s389 = sphi 0, %s387
      %s390 = sphi 0, %s389
      %s404 = sphi 0, %s390
      %s408 = sphi 0, %s408
      %s410 = sphi 0, %s408
      %s411 = sphi 0, %s410
      %s425 = sphi 0, %s411
      %s431 = sphi 0, %s433
      %s434 = sphi 0, %s431
      %s435 = sphi 0, %s434
      %s451 = sphi 0, %s435
    $region4: #{tpu_custom_call.1} parent=1 // loop_header_branch
      %36 = sbr.rel (%p34) target = $region8
    $region5: #{tpu_custom_call.1} parent=1 // loop_body
      %s38 = ssub.s32 %s33, 1
      %s39 = ssub.s32 %s33, 2
      %s40 = sadd.s32 %s33, 1
      %s41 = ssub.s32 %s33, %s40
      %p42 = scmp.eq.s32.totalorder %s41, 0
      %s44 = sadd.s32 %s43, 1
      %s45 = scalar_select %p42, %s43, %s44
      %p48 = pneg %p42
      %p49 = scmp.eq.s32.totalorder %s33, 1
      %p50 = por %p48, %p49
      %p51 = scmp.ne.s32.totalorder %s43, %s46
      %p52 = scmp.eq.s32.totalorder %s33, 0
      %p53 = por %p51, %p52
      %p54 = scmp.ne.s32.totalorder %s43, %s46
      %p55 = scmp.eq.s32.totalorder %s38, 1
      %p56 = por %p54, %p55
      %p57 = scmp.ne.s32.totalorder %s46, %s47
      %p58 = scmp.eq.s32.totalorder %s38, 0
      %p59 = por %p57, %p58
      %p60 = scmp.ne.s32.totalorder %s46, %s47
      %p61 = scmp.eq.s32.totalorder %s39, 1
      %p62 = por %p60, %p61
      %p64 = scmp.ne.s32.totalorder %s47, %s63
      %p65 = scmp.eq.s32.totalorder %s39, 0
      %p66 = por %p64, %p65
      %s67 = ssub.s32 %s33, %s40
      %p68 = scmp.eq.s32.totalorder %s67, 0
      %s70 = sadd.s32 %s69, 1
      %s71 = scalar_select %p68, %s69, %s70
      %p74 = pneg %p68
      %p75 = scmp.eq.s32.totalorder %s33, 1
      %p76 = por %p74, %p75
      %p77 = scmp.ne.s32.totalorder %s69, %s72
      %p78 = scmp.eq.s32.totalorder %s33, 0
      %p79 = por %p77, %p78
      %p80 = scmp.ne.s32.totalorder %s69, %s72
      %p81 = scmp.eq.s32.totalorder %s38, 1
      %p82 = por %p80, %p81
      %p83 = scmp.ne.s32.totalorder %s72, %s73
      %p84 = scmp.eq.s32.totalorder %s38, 0
      %p85 = por %p83, %p84
      %p86 = scmp.ne.s32.totalorder %s72, %s73
      %p87 = scmp.eq.s32.totalorder %s39, 1
      %p88 = por %p86, %p87
      %p90 = scmp.ne.s32.totalorder %s73, %s89
      %p91 = scmp.eq.s32.totalorder %s39, 0
      %p92 = por %p90, %p91
      %s94 = sadd.s32 %s93, 1
      %p97 = scmp.eq.s32.totalorder %s33, 1
      %p98 = scmp.ne.s32.totalorder %s93, %s95
      %p99 = scmp.eq.s32.totalorder %s33, 0
      %p100 = por %p98, %p99
      %p101 = scmp.ne.s32.totalorder %s93, %s95
      %p102 = scmp.eq.s32.totalorder %s38, 1
      %p103 = por %p101, %p102
      %p104 = scmp.ne.s32.totalorder %s95, %s96
      %p105 = scmp.eq.s32.totalorder %s38, 0
      %p106 = por %p104, %p105
      %p107 = scmp.ne.s32.totalorder %s95, %s96
      %p108 = scmp.eq.s32.totalorder %s39, 1
      %p109 = por %p107, %p108
      %p111 = scmp.ne.s32.totalorder %s96, %s110
      %p112 = scmp.eq.s32.totalorder %s39, 0
      %p113 = por %p111, %p112
      %s115 = sadd.s32 %s114, 1
      %p118 = scmp.eq.s32.totalorder %s33, 1
      %p119 = scmp.ne.s32.totalorder %s114, %s116
      %p120 = scmp.eq.s32.totalorder %s33, 0
      %p121 = por %p119, %p120
      %p122 = scmp.ne.s32.totalorder %s114, %s116
      %p123 = scmp.eq.s32.totalorder %s38, 1
      %p124 = por %p122, %p123
      %p125 = scmp.ne.s32.totalorder %s116, %s117
      %p126 = scmp.eq.s32.totalorder %s38, 0
      %p127 = por %p125, %p126
      %p128 = scmp.ne.s32.totalorder %s116, %s117
      %p129 = scmp.eq.s32.totalorder %s39, 1
      %p130 = por %p128, %p129
      %p132 = scmp.ne.s32.totalorder %s117, %s131
      %p133 = scmp.eq.s32.totalorder %s39, 0
      %p134 = por %p132, %p133
      %s136 = sadd.s32 %s135, 1
      %p139 = scmp.eq.s32.totalorder %s33, 1
      %p140 = scmp.ne.s32.totalorder %s135, %s137
      %p141 = scmp.eq.s32.totalorder %s33, 0
      %p142 = por %p140, %p141
      %p143 = scmp.ne.s32.totalorder %s135, %s137
      %p144 = scmp.eq.s32.totalorder %s38, 1
      %p145 = por %p143, %p144
      %p146 = scmp.ne.s32.totalorder %s137, %s138
      %p147 = scmp.eq.s32.totalorder %s38, 0
      %p148 = por %p146, %p147
      %p149 = scmp.ne.s32.totalorder %s137, %s138
      %p150 = scmp.eq.s32.totalorder %s39, 1
      %p151 = por %p149, %p150
      %p153 = scmp.ne.s32.totalorder %s138, %s152
      %p154 = scmp.eq.s32.totalorder %s39, 0
      %p155 = por %p153, %p154
      %s157 = sadd.s32 %s156, 1
      %p160 = scmp.eq.s32.totalorder %s33, 1
      %p161 = scmp.ne.s32.totalorder %s156, %s158
      %p162 = scmp.eq.s32.totalorder %s33, 0
      %p163 = por %p161, %p162
      %p164 = scmp.ne.s32.totalorder %s156, %s158
      %p165 = scmp.eq.s32.totalorder %s38, 1
      %p166 = por %p164, %p165
      %p167 = scmp.ne.s32.totalorder %s158, %s159
      %p168 = scmp.eq.s32.totalorder %s38, 0
      %p169 = por %p167, %p168
      %p170 = scmp.ne.s32.totalorder %s158, %s159
      %p171 = scmp.eq.s32.totalorder %s39, 1
      %p172 = por %p170, %p171
      %p174 = scmp.ne.s32.totalorder %s159, %s173
      %p175 = scmp.eq.s32.totalorder %s39, 0
      %p176 = por %p174, %p175
      %s178 = sadd.s32 %s177, 1
      %p181 = scmp.eq.s32.totalorder %s33, 1
      %p182 = scmp.ne.s32.totalorder %s177, %s179
      %p183 = scmp.eq.s32.totalorder %s33, 0
      %p184 = por %p182, %p183
      %p185 = scmp.ne.s32.totalorder %s177, %s179
      %p186 = scmp.eq.s32.totalorder %s38, 1
      %p187 = por %p185, %p186
      %p188 = scmp.ne.s32.totalorder %s179, %s180
      %p189 = scmp.eq.s32.totalorder %s38, 0
      %p190 = por %p188, %p189
      %p191 = scmp.ne.s32.totalorder %s179, %s180
      %p192 = scmp.eq.s32.totalorder %s39, 1
      %p193 = por %p191, %p192
      %p195 = scmp.ne.s32.totalorder %s180, %s194
      %p196 = scmp.eq.s32.totalorder %s39, 0
      %p197 = por %p195, %p196
      %s199 = sadd.s32 %s198, 1
      %p202 = scmp.eq.s32.totalorder %s33, 1
      %p203 = scmp.ne.s32.totalorder %s198, %s200
      %p204 = scmp.eq.s32.totalorder %s33, 0
      %p205 = por %p203, %p204
      %p206 = scmp.ne.s32.totalorder %s198, %s200
      %p207 = scmp.eq.s32.totalorder %s38, 1
      %p208 = por %p206, %p207
      %p209 = scmp.ne.s32.totalorder %s200, %s201
      %p210 = scmp.eq.s32.totalorder %s38, 0
      %p211 = por %p209, %p210
      %p212 = scmp.ne.s32.totalorder %s200, %s201
      %p213 = scmp.eq.s32.totalorder %s39, 1
      %p214 = por %p212, %p213
      %p216 = scmp.ne.s32.totalorder %s201, %s215
      %p217 = scmp.eq.s32.totalorder %s39, 0
      %p218 = por %p216, %p217
      %s220 = sadd.s32 %s219, 1
      %p223 = scmp.eq.s32.totalorder %s33, 1
      %p224 = scmp.ne.s32.totalorder %s219, %s221
      %p225 = scmp.eq.s32.totalorder %s33, 0
      %p226 = por %p224, %p225
      %p227 = scmp.ne.s32.totalorder %s219, %s221
      %p228 = scmp.eq.s32.totalorder %s38, 1
      %p229 = por %p227, %p228
      %p230 = scmp.ne.s32.totalorder %s221, %s222
      %p231 = scmp.eq.s32.totalorder %s38, 0
      %p232 = por %p230, %p231
      %p233 = scmp.ne.s32.totalorder %s221, %s222
      %p234 = scmp.eq.s32.totalorder %s39, 1
      %p235 = por %p233, %p234
      %p237 = scmp.ne.s32.totalorder %s222, %s236
      %p238 = scmp.eq.s32.totalorder %s39, 0
      %p239 = por %p237, %p238
      %s241 = sadd.s32 %s240, 1
      %p244 = scmp.eq.s32.totalorder %s33, 1
      %p245 = scmp.ne.s32.totalorder %s240, %s242
      %p246 = scmp.eq.s32.totalorder %s33, 0
      %p247 = por %p245, %p246
      %p248 = scmp.ne.s32.totalorder %s240, %s242
      %p249 = scmp.eq.s32.totalorder %s38, 1
      %p250 = por %p248, %p249
      %p251 = scmp.ne.s32.totalorder %s242, %s243
      %p252 = scmp.eq.s32.totalorder %s38, 0
      %p253 = por %p251, %p252
      %p254 = scmp.ne.s32.totalorder %s242, %s243
      %p255 = scmp.eq.s32.totalorder %s39, 1
      %p256 = por %p254, %p255
      %p258 = scmp.ne.s32.totalorder %s243, %s257
      %p259 = scmp.eq.s32.totalorder %s39, 0
      %p260 = por %p258, %p259
      %s262 = sadd.s32 %s261, 1
      %p265 = scmp.eq.s32.totalorder %s33, 1
      %p266 = scmp.ne.s32.totalorder %s261, %s263
      %p267 = scmp.eq.s32.totalorder %s33, 0
      %p268 = por %p266, %p267
      %p269 = scmp.ne.s32.totalorder %s261, %s263
      %p270 = scmp.eq.s32.totalorder %s38, 1
      %p271 = por %p269, %p270
      %p272 = scmp.ne.s32.totalorder %s263, %s264
      %p273 = scmp.eq.s32.totalorder %s38, 0
      %p274 = por %p272, %p273
      %p275 = scmp.ne.s32.totalorder %s263, %s264
      %p276 = scmp.eq.s32.totalorder %s39, 1
      %p277 = por %p275, %p276
      %p279 = scmp.ne.s32.totalorder %s264, %s278
      %p280 = scmp.eq.s32.totalorder %s39, 0
      %p281 = por %p279, %p280
      %s283 = sadd.s32 %s282, 1
      %p286 = scmp.eq.s32.totalorder %s33, 1
      %p287 = scmp.ne.s32.totalorder %s282, %s284
      %p288 = scmp.eq.s32.totalorder %s33, 0
      %p289 = por %p287, %p288
      %p290 = scmp.ne.s32.totalorder %s282, %s284
      %p291 = scmp.eq.s32.totalorder %s38, 1
      %p292 = por %p290, %p291
      %p293 = scmp.ne.s32.totalorder %s284, %s285
      %p294 = scmp.eq.s32.totalorder %s38, 0
      %p295 = por %p293, %p294
      %p296 = scmp.ne.s32.totalorder %s284, %s285
      %p297 = scmp.eq.s32.totalorder %s39, 1
      %p298 = por %p296, %p297
      %p300 = scmp.ne.s32.totalorder %s285, %s299
      %p301 = scmp.eq.s32.totalorder %s39, 0
      %p302 = por %p300, %p301
      %s304 = sadd.s32 %s303, 1
      %p307 = scmp.eq.s32.totalorder %s33, 1
      %p308 = scmp.ne.s32.totalorder %s303, %s305
      %p309 = scmp.eq.s32.totalorder %s33, 0
      %p310 = por %p308, %p309
      %p311 = scmp.ne.s32.totalorder %s303, %s305
      %p312 = scmp.eq.s32.totalorder %s38, 1
      %p313 = por %p311, %p312
      %p314 = scmp.ne.s32.totalorder %s305, %s306
      %p315 = scmp.eq.s32.totalorder %s38, 0
      %p316 = por %p314, %p315
      %p317 = scmp.ne.s32.totalorder %s305, %s306
      %p318 = scmp.eq.s32.totalorder %s39, 1
      %p319 = por %p317, %p318
      %p321 = scmp.ne.s32.totalorder %s306, %s320
      %p322 = scmp.eq.s32.totalorder %s39, 0
      %p323 = por %p321, %p322
      %s325 = sadd.s32 %s324, 1
      %p328 = scmp.eq.s32.totalorder %s33, 1
      %p329 = scmp.ne.s32.totalorder %s324, %s326
      %p330 = scmp.eq.s32.totalorder %s33, 0
      %p331 = por %p329, %p330
      %p332 = scmp.ne.s32.totalorder %s324, %s326
      %p333 = scmp.eq.s32.totalorder %s38, 1
      %p334 = por %p332, %p333
      %p335 = scmp.ne.s32.totalorder %s326, %s327
      %p336 = scmp.eq.s32.totalorder %s38, 0
      %p337 = por %p335, %p336
      %p338 = scmp.ne.s32.totalorder %s326, %s327
      %p339 = scmp.eq.s32.totalorder %s39, 1
      %p340 = por %p338, %p339
      %p342 = scmp.ne.s32.totalorder %s327, %s341
      %p343 = scmp.eq.s32.totalorder %s39, 0
      %p344 = por %p342, %p343
      %s346 = sadd.s32 %s345, 1
      %p349 = scmp.eq.s32.totalorder %s33, 1
      %p350 = scmp.ne.s32.totalorder %s345, %s347
      %p351 = scmp.eq.s32.totalorder %s33, 0
      %p352 = por %p350, %p351
      %p353 = scmp.ne.s32.totalorder %s345, %s347
      %p354 = scmp.eq.s32.totalorder %s38, 1
      %p355 = por %p353, %p354
      %p356 = scmp.ne.s32.totalorder %s347, %s348
      %p357 = scmp.eq.s32.totalorder %s38, 0
      %p358 = por %p356, %p357
      %p359 = scmp.ne.s32.totalorder %s347, %s348
      %p360 = scmp.eq.s32.totalorder %s39, 1
      %p361 = por %p359, %p360
      %p363 = scmp.ne.s32.totalorder %s348, %s362
      %p364 = scmp.eq.s32.totalorder %s39, 0
      %p365 = por %p363, %p364
      %s367 = sadd.s32 %s366, 1
      %p370 = scmp.eq.s32.totalorder %s33, 1
      %p371 = scmp.ne.s32.totalorder %s366, %s368
      %p372 = scmp.eq.s32.totalorder %s33, 0
      %p373 = por %p371, %p372
      %p374 = scmp.ne.s32.totalorder %s366, %s368
      %p375 = scmp.eq.s32.totalorder %s38, 1
      %p376 = por %p374, %p375
      %p377 = scmp.ne.s32.totalorder %s368, %s369
      %p378 = scmp.eq.s32.totalorder %s38, 0
      %p379 = por %p377, %p378
      %p380 = scmp.ne.s32.totalorder %s368, %s369
      %p381 = scmp.eq.s32.totalorder %s39, 1
      %p382 = por %p380, %p381
      %p384 = scmp.ne.s32.totalorder %s369, %s383
      %p385 = scmp.eq.s32.totalorder %s39, 0
      %p386 = por %p384, %p385
      %s388 = sadd.s32 %s387, 1
      %p391 = scmp.eq.s32.totalorder %s33, 1
      %p392 = scmp.ne.s32.totalorder %s387, %s389
      %p393 = scmp.eq.s32.totalorder %s33, 0
      %p394 = por %p392, %p393
      %p395 = scmp.ne.s32.totalorder %s387, %s389
      %p396 = scmp.eq.s32.totalorder %s38, 1
      %p397 = por %p395, %p396
      %p398 = scmp.ne.s32.totalorder %s389, %s390
      %p399 = scmp.eq.s32.totalorder %s38, 0
      %p400 = por %p398, %p399
      %p401 = scmp.ne.s32.totalorder %s389, %s390
      %p402 = scmp.eq.s32.totalorder %s39, 1
      %p403 = por %p401, %p402
      %p405 = scmp.ne.s32.totalorder %s390, %s404
      %p406 = scmp.eq.s32.totalorder %s39, 0
      %p407 = por %p405, %p406
      %s409 = sadd.s32 %s408, 1
      %p412 = scmp.eq.s32.totalorder %s33, 1
      %p413 = scmp.ne.s32.totalorder %s408, %s410
      %p414 = scmp.eq.s32.totalorder %s33, 0
      %p415 = por %p413, %p414
      %p416 = scmp.ne.s32.totalorder %s408, %s410
      %p417 = scmp.eq.s32.totalorder %s38, 1
      %p418 = por %p416, %p417
      %p419 = scmp.ne.s32.totalorder %s410, %s411
      %p420 = scmp.eq.s32.totalorder %s38, 0
      %p421 = por %p419, %p420
      %p422 = scmp.ne.s32.totalorder %s410, %s411
      %p423 = scmp.eq.s32.totalorder %s39, 1
      %p424 = por %p422, %p423
      %p426 = scmp.ne.s32.totalorder %s411, %s425
      %p427 = scmp.eq.s32.totalorder %s39, 0
      %p428 = por %p426, %p427
      %s429 = ssub.s32 %s33, %s40
      %p430 = scmp.eq.s32.totalorder %s429, 0
      %s432 = sadd.s32 %s431, 1
      %s433 = scalar_select %p430, %s431, %s432
      %p436 = pneg %p430
      %p437 = scmp.eq.s32.totalorder %s33, 1
      %p438 = por %p436, %p437
      %p439 = scmp.ne.s32.totalorder %s431, %s434
      %p440 = scmp.eq.s32.totalorder %s33, 0
      %p441 = por %p439, %p440
      %p442 = scmp.ne.s32.totalorder %s431, %s434
      %p443 = scmp.eq.s32.totalorder %s38, 1
      %p444 = por %p442, %p443
      %p445 = scmp.ne.s32.totalorder %s434, %s435
      %p446 = scmp.eq.s32.totalorder %s38, 0
      %p447 = por %p445, %p446
      %p448 = scmp.ne.s32.totalorder %s434, %s435
      %p449 = scmp.eq.s32.totalorder %s39, 1
      %p450 = por %p448, %p449
      %p452 = scmp.ne.s32.totalorder %s435, %s451
      %p453 = scmp.eq.s32.totalorder %s39, 0
      %p454 = por %p452, %p453
      %p455 = scmp.le.s32.totalorder 1, %s33
      %p456 = scmp.lt.s32.totalorder %s33, 3
      %p457 = pnand %p455, %p456
      %p458 = pneg %p457
      // Predicated region
      $region9: #{tpu_custom_call.1} parent=5 // pred_check
        _
      $region10: #{tpu_custom_call.1} parent=5 // pred_check_branch
        %460 = sbr.rel (%p457) target = $region12
      $region11: #{tpu_custom_call.1} parent=5 // pred_region
        %s461 = ssub.s32 %s33, 1
        // Predicated region
        $region13: #{tpu_custom_call.1} parent=11 // pred_check
          %p462 = pneg %p106
        $region14: #{tpu_custom_call.1} parent=11 // pred_check_branch
          %464 = sbr.rel (%p462) target = $region16
        $region15: #{tpu_custom_call.1} parent=11 // pred_region
          %466 = vsyncadd [#allocation6], 0
          %s467 = sshll.u32 %s2, 4
          %s468 = int_to_ptr.hbm [resolvable:$true] %s467
          %s469 = sshll.u32 [#allocation5], 4
          %s470 = int_to_ptr.vmem [resolvable:$true] %s469
          %475 = dma.hbm_to_vmem [thread:$0]  %s468, 1024, %s470, [#allocation6], 64, 64, 4
        $region16: #{tpu_custom_call.1} parent=11 // pred_fallthru
          _
        // Predicated region
        $region17: #{tpu_custom_call.1} parent=11 // pred_check
          %p476 = pneg %p127
        $region18: #{tpu_custom_call.1} parent=11 // pred_check_branch
          %478 = sbr.rel (%p476) target = $region20
        $region19: #{tpu_custom_call.1} parent=11 // pred_region
          _
        $region20: #{tpu_custom_call.1} parent=11 // pred_fallthru
          _
        // Predicated region
        $region21: #{tpu_custom_call.1} parent=11 // pred_check
          %p479 = pneg %p148
        $region22: #{tpu_custom_call.1} parent=11 // pred_check_branch
          %481 = sbr.rel (%p479) target = $region24
        $region23: #{tpu_custom_call.1} parent=11 // pred_region
          _
        $region24: #{tpu_custom_call.1} parent=11 // pred_fallthru
          _
        // Predicated region
        $region25: #{tpu_custom_call.1} parent=11 // pred_check
          %p482 = pneg %p169
        $region26: #{tpu_custom_call.1} parent=11 // pred_check_branch
          %484 = sbr.rel (%p482) target = $region28
        $region27: #{tpu_custom_call.1} parent=11 // pred_region
          _
        $region28: #{tpu_custom_call.1} parent=11 // pred_fallthru
          _
        // Predicated region
        $region29: #{tpu_custom_call.1} parent=11 // pred_check
          %p485 = pneg %p190
        $region30: #{tpu_custom_call.1} parent=11 // pred_check_branch
          %487 = sbr.rel (%p485) target = $region32
        $region31: #{tpu_custom_call.1} parent=11 // pred_region
          _
        $region32: #{tpu_custom_call.1} parent=11 // pred_fallthru
          _
        // Predicated region
        $region33: #{tpu_custom_call.1} parent=11 // pred_check
          %p488 = pneg %p211
        $region34: #{tpu_custom_call.1} parent=11 // pred_check_branch
          %490 = sbr.rel (%p488) target = $region36
        $region35: #{tpu_custom_call.1} parent=11 // pred_region
          _
        $region36: #{tpu_custom_call.1} parent=11 // pred_fallthru
          _
        // Predicated region
        $region37: #{tpu_custom_call.1} parent=11 // pred_check
          %p491 = pneg %p232
        $region38: #{tpu_custom_call.1} parent=11 // pred_check_branch
          %493 = sbr.rel (%p491) target = $region40
        $region39: #{tpu_custom_call.1} parent=11 // pred_region
          _
        $region40: #{tpu_custom_call.1} parent=11 // pred_fallthru
          _
        // Predicated region
        $region41: #{tpu_custom_call.1} parent=11 // pred_check
          %p494 = pneg %p253
        $region42: #{tpu_custom_call.1} parent=11 // pred_check_branch
          %496 = sbr.rel (%p494) target = $region44
        $region43: #{tpu_custom_call.1} parent=11 // pred_region
          %498 = vsyncadd [#allocation6], 0
          %s500 = sshll.u32 %s9, 4
          %s501 = int_to_ptr.hbm [resolvable:$true] %s500
          %s502 = sshll.u32 [#allocation7], 4
          %s503 = int_to_ptr.vmem [resolvable:$true] %s502
          %505 = dma.hbm_to_vmem [thread:$0]  %s501, 16, %s503, [#allocation6]
        $region44: #{tpu_custom_call.1} parent=11 // pred_fallthru
          _
        // Predicated region
        $region45: #{tpu_custom_call.1} parent=11 // pred_check
          %p506 = pneg %p274
        $region46: #{tpu_custom_call.1} parent=11 // pred_check_branch
          %508 = sbr.rel (%p506) target = $region48
        $region47: #{tpu_custom_call.1} parent=11 // pred_region
          %510 = vsyncadd [#allocation9], 0
          %s511 = sshll.u32 %s10, 4
          %s512 = int_to_ptr.hbm [resolvable:$true] %s511
          %s513 = sshll.u32 [#allocation8], 4
          %s514 = int_to_ptr.vmem [resolvable:$true] %s513
          %519 = dma.hbm_to_vmem [thread:$0]  %s512, 1024, %s514, [#allocation9], 64, 64, 4
        $region48: #{tpu_custom_call.1} parent=11 // pred_fallthru
          _
        // Predicated region
        $region49: #{tpu_custom_call.1} parent=11 // pred_check
          %p520 = pneg %p295
        $region50: #{tpu_custom_call.1} parent=11 // pred_check_branch
          %522 = sbr.rel (%p520) target = $region52
        $region51: #{tpu_custom_call.1} parent=11 // pred_region
          %524 = vsyncadd [#allocation9], 0
          %s526 = sshll.u32 %s11, 4
          %s527 = int_to_ptr.hbm [resolvable:$true] %s526
          %s528 = sshll.u32 [#allocation10], 4
          %s529 = int_to_ptr.vmem [resolvable:$true] %s528
          %531 = dma.hbm_to_vmem [thread:$0]  %s527, 16, %s529, [#allocation9]
        $region52: #{tpu_custom_call.1} parent=11 // pred_fallthru
          _
        // Predicated region
        $region53: #{tpu_custom_call.1} parent=11 // pred_check
          %p532 = pneg %p316
        $region54: #{tpu_custom_call.1} parent=11 // pred_check_branch
          %534 = sbr.rel (%p532) target = $region56
        $region55: #{tpu_custom_call.1} parent=11 // pred_region
          _
        $region56: #{tpu_custom_call.1} parent=11 // pred_fallthru
          _
        // Predicated region
        $region57: #{tpu_custom_call.1} parent=11 // pred_check
          %p535 = pneg %p337
        $region58: #{tpu_custom_call.1} parent=11 // pred_check_branch
          %537 = sbr.rel (%p535) target = $region60
        $region59: #{tpu_custom_call.1} parent=11 // pred_region
          _
        $region60: #{tpu_custom_call.1} parent=11 // pred_fallthru
          _
        // Predicated region
        $region61: #{tpu_custom_call.1} parent=11 // pred_check
          %p538 = pneg %p358
        $region62: #{tpu_custom_call.1} parent=11 // pred_check_branch
          %540 = sbr.rel (%p538) target = $region64
        $region63: #{tpu_custom_call.1} parent=11 // pred_region
          _
        $region64: #{tpu_custom_call.1} parent=11 // pred_fallthru
          _
        // Predicated region
        $region65: #{tpu_custom_call.1} parent=11 // pred_check
          %p541 = pneg %p379
        $region66: #{tpu_custom_call.1} parent=11 // pred_check_branch
          %543 = sbr.rel (%p541) target = $region68
        $region67: #{tpu_custom_call.1} parent=11 // pred_region
          _
        $region68: #{tpu_custom_call.1} parent=11 // pred_fallthru
          _
        // Predicated region
        $region69: #{tpu_custom_call.1} parent=11 // pred_check
          %p544 = pneg %p400
        $region70: #{tpu_custom_call.1} parent=11 // pred_check_branch
          %546 = sbr.rel (%p544) target = $region72
        $region71: #{tpu_custom_call.1} parent=11 // pred_region
          %548 = vsyncadd [#allocation12], 0
          %s549 = sshll.u32 %s16, 4
          %s550 = int_to_ptr.hbm [resolvable:$true] %s549
          %s551 = sshll.u32 [#allocation11], 4
          %s552 = int_to_ptr.vmem [resolvable:$true] %s551
          %557 = dma.hbm_to_vmem [thread:$0]  %s550, 2048, %s552, [#allocation12], 64, 64, 4
        $region72: #{tpu_custom_call.1} parent=11 // pred_fallthru
          _
        // Predicated region
        $region73: #{tpu_custom_call.1} parent=11 // pred_check
          %p558 = pneg %p421
        $region74: #{tpu_custom_call.1} parent=11 // pred_check_branch
          %560 = sbr.rel (%p558) target = $region76
        $region75: #{tpu_custom_call.1} parent=11 // pred_region
          _
        $region76: #{tpu_custom_call.1} parent=11 // pred_fallthru
          _
      $region12: #{tpu_custom_call.1} parent=5 // pred_fallthru
        _
      %p561 = scmp.lt.s32.totalorder %s33, 2
      // Predicated region
      $region77: #{tpu_custom_call.1} parent=5 // pred_check
        %p562 = pneg %p561
      $region78: #{tpu_custom_call.1} parent=5 // pred_check_branch
        %564 = sbr.rel (%p562) target = $region80
      $region79: #{tpu_custom_call.1} parent=5 // pred_region
        // Predicated region
        $region81: #{tpu_custom_call.1} parent=79 // pred_check
          %p565 = pneg %p53
        $region82: #{tpu_custom_call.1} parent=79 // pred_check_branch
          %567 = sbr.rel (%p565) target = $region84
        $region83: #{tpu_custom_call.1} parent=79 // pred_region
          %s568 = sand.u32 %s43, 1
          %s569 = scalar_lea.sflag [#allocation3], %s568
          %s570 = sand.u32 %s43, 1
          %s571 = smul.addr %s570, 32
          %s572 = scalar_lea.vmem [#allocation2], %s571
          %s573 = smul.u32 8, %s33
          %575 = vsyncadd %s569, 0
          %s576 = smul.addr %s573, 4
          %s577 = scalar_lea.hbm %s0, %s576
          %s578 = sshll.u32 %s577, 4
          %s579 = int_to_ptr.hbm [resolvable:$true] %s578
          %s580 = sshll.u32 %s572, 4
          %s581 = int_to_ptr.vmem [resolvable:$true] %s580
          %586 = dma.hbm_to_vmem [thread:$0]  %s579, 512, %s581, %s569, 64, 64, 4
        $region84: #{tpu_custom_call.1} parent=79 // pred_fallthru
          _
        // Predicated region
        $region85: #{tpu_custom_call.1} parent=79 // pred_check
          %p587 = pneg %p79
        $region86: #{tpu_custom_call.1} parent=79 // pred_check_branch
          %589 = sbr.rel (%p587) target = $region88
        $region87: #{tpu_custom_call.1} parent=79 // pred_region
          %s590 = smul.u32 8, %s33
          %p591 = scmp.lt.s32.totalorder %s590, 15
          %s592 = scalar_select %p591, %s590, 15
          %s593 = smul.addr %s592, 8
          %s594 = scalar_lea.vmem %s1, %s593
          %s595 = smul.u32 8, %s33
        $region88: #{tpu_custom_call.1} parent=79 // pred_fallthru
          _
      $region80: #{tpu_custom_call.1} parent=5 // pred_fallthru
        _
      %p596 = scmp.le.s32.totalorder 1, %s33
      %p597 = scmp.lt.s32.totalorder %s33, 3
      %p598 = pnand %p596, %p597
      %p599 = pneg %p598
      // Predicated region
      $region89: #{tpu_custom_call.1} parent=5 // pred_check
        _
      $region90: #{tpu_custom_call.1} parent=5 // pred_check_branch
        %601 = sbr.rel (%p598) target = $region92
      $region91: #{tpu_custom_call.1} parent=5 // pred_region
        %s602 = ssub.s32 %s33, 1
        %s603 = sand.u32 %s46, 1
        %s604 = scalar_lea.sflag [#allocation3], %s603
        %s605 = sand.u32 %s46, 1
        %s606 = smul.addr %s605, 32
        %s607 = scalar_lea.vmem [#allocation2], %s606
        // Predicated region
        $region93: #{tpu_custom_call.1} parent=91 // pred_check
          %p608 = pneg %p59
        $region94: #{tpu_custom_call.1} parent=91 // pred_check_branch
          %610 = sbr.rel (%p608) target = $region96
        $region95: #{tpu_custom_call.1} parent=91 // pred_region
          %612 = dma.done %s604, 512
        $region96: #{tpu_custom_call.1} parent=91 // pred_fallthru
          _
        // Predicated region
        $region97: #{tpu_custom_call.1} parent=91 // pred_check
          %p613 = pneg %p106
        $region98: #{tpu_custom_call.1} parent=91 // pred_check_branch
          %615 = sbr.rel (%p613) target = $region100
        $region99: #{tpu_custom_call.1} parent=91 // pred_region
          %617 = dma.done [#allocation6], 1024
        $region100: #{tpu_custom_call.1} parent=91 // pred_fallthru
          _
        // Predicated region
        $region101: #{tpu_custom_call.1} parent=91 // pred_check
          %p618 = pneg %p253
        $region102: #{tpu_custom_call.1} parent=91 // pred_check_branch
          %620 = sbr.rel (%p618) target = $region104
        $region103: #{tpu_custom_call.1} parent=91 // pred_region
          %622 = dma.done [#allocation6], 16
        $region104: #{tpu_custom_call.1} parent=91 // pred_fallthru
          _
        // Predicated region
        $region105: #{tpu_custom_call.1} parent=91 // pred_check
          %p623 = pneg %p274
        $region106: #{tpu_custom_call.1} parent=91 // pred_check_branch
          %625 = sbr.rel (%p623) target = $region108
        $region107: #{tpu_custom_call.1} parent=91 // pred_region
          %627 = dma.done [#allocation9], 1024
        $region108: #{tpu_custom_call.1} parent=91 // pred_fallthru
          _
        // Predicated region
        $region109: #{tpu_custom_call.1} parent=91 // pred_check
          %p628 = pneg %p295
        $region110: #{tpu_custom_call.1} parent=91 // pred_check_branch
          %630 = sbr.rel (%p628) target = $region112
        $region111: #{tpu_custom_call.1} parent=91 // pred_region
          %632 = dma.done [#allocation9], 16
        $region112: #{tpu_custom_call.1} parent=91 // pred_fallthru
          _
        // Predicated region
        $region113: #{tpu_custom_call.1} parent=91 // pred_check
          %p633 = pneg %p400
        $region114: #{tpu_custom_call.1} parent=91 // pred_check_branch
          %635 = sbr.rel (%p633) target = $region116
        $region115: #{tpu_custom_call.1} parent=91 // pred_region
          %637 = dma.done [#allocation12], 2048
        $region116: #{tpu_custom_call.1} parent=91 // pred_fallthru
          _
        %s638 = sand.u32 %s46, 1
        %s639 = scalar_lea.sflag [#allocation3], %s638
        %s640 = sand.u32 %s46, 1
        %s641 = smul.addr %s640, 32
        %s642 = scalar_lea.vmem [#allocation2], %s641
        %p643 = pneg %p59
        %p644 = pneg %p56
        %s645 = smul.u32 8, %s38
        %p646 = scmp.lt.s32.totalorder %s645, 15
        %s647 = scalar_select %p646, %s645, 15
        %s648 = smul.addr %s647, 8
        %s649 = scalar_lea.vmem %s1, %s648
        %p650 = pneg %p85
        %p651 = pneg %p82
        %p652 = pneg %p106
        %p653 = pneg %p103
        %p654 = pneg %p127
        %p655 = pneg %p124
        %p656 = pneg %p148
        %p657 = pneg %p145
        %p658 = pneg %p169
        %p659 = pneg %p166
        %p660 = pneg %p190
        %p661 = pneg %p187
        %p662 = pneg %p211
        %p663 = pneg %p208
        %p664 = pneg %p232
        %p665 = pneg %p229
        %p666 = pneg %p253
        %p667 = pneg %p250
        %p668 = pneg %p274
        %p669 = pneg %p271
        %p670 = pneg %p295
        %p671 = pneg %p292
        %p672 = pneg %p316
        %p673 = pneg %p313
        %p674 = pneg %p337
        %p675 = pneg %p334
        %p676 = pneg %p358
        %p677 = pneg %p355
        %p678 = pneg %p379
        %p679 = pneg %p376
        %p680 = pneg %p400
        %p681 = pneg %p397
        %p682 = pneg %p421
        %p683 = pneg %p418
        %p684 = pneg %p447
        %p685 = pneg %p444
        %s686 = sand.u32 %s434, 1
        %s687 = scalar_lea.sflag [#allocation4], %s686
        %s688 = sand.u32 %s434, 1
        %s689 = smul.addr %s688, 8
        %s690 = scalar_lea.vmem [#allocation13], %s689
        %s691 = smul.u32 8, %s38
        %s692 = smul.u32 8, %s38
        %p693 = scmp.lt.s32.totalorder %s692, 15
        %s694 = scalar_select %p693, %s692, 15
        %s695 = smul.addr %s694, 8
        %s696 = scalar_lea.vmem %s1, %s695
        %s697 = smul.u32 8, %s38
        %v698 = vld [vmem:[%s607] sm:$0xf]
        %v699 = vld [vmem:[%s607 + $0x4] sm:$0xf]
        %v700 = vld [vmem:[%s607 + $0x8] sm:$0xf]
        %v701 = vld [vmem:[%s607 + $0xc] sm:$0xf]
        %v702 = vld [vmem:[%s607 + $0x10] sm:$0xf]
        %v703 = vld [vmem:[%s607 + $0x14] sm:$0xf]
        %v704 = vld [vmem:[%s607 + $0x18] sm:$0xf]
        %v705 = vld [vmem:[%s607 + $0x1c] sm:$0xf]
        %v706 = vld [vmem:[%s696] sm:$0xff]
        %v707 = vld [vmem:[%s696 + $0x8] sm:$0xff]
        %v708 = vld [vmem:[%s696 + $0x10] sm:$0xff]
        %v709 = vld [vmem:[%s696 + $0x18] sm:$0xff]
        %v710 = vld [vmem:[%s696 + $0x20] sm:$0xff]
        %v711 = vld [vmem:[%s696 + $0x28] sm:$0xff]
        %v712 = vld [vmem:[%s696 + $0x30] sm:$0xff]
        %v713 = vld [vmem:[%s696 + $0x38] sm:$0xff]
        %v714 = vld [vmem:[#allocation5] sm:$0xf]
        %v715 = vld [vmem:[#allocation5 + $0x4] sm:$0xf]
        %v716 = vld [vmem:[#allocation5 + $0x8] sm:$0xf]
        %v717 = vld [vmem:[#allocation5 + $0xc] sm:$0xf]
        %v718 = vld [vmem:[#allocation5 + $0x10] sm:$0xf]
        %v719 = vld [vmem:[#allocation5 + $0x14] sm:$0xf]
        %v720 = vld [vmem:[#allocation5 + $0x18] sm:$0xf]
        %v721 = vld [vmem:[#allocation5 + $0x1c] sm:$0xf]
        %v722 = vld [vmem:[#allocation5 + $0x20] sm:$0xf]
        %v723 = vld [vmem:[#allocation5 + $0x24] sm:$0xf]
        %v724 = vld [vmem:[#allocation5 + $0x28] sm:$0xf]
        %v725 = vld [vmem:[#allocation5 + $0x2c] sm:$0xf]
        %v726 = vld [vmem:[#allocation5 + $0x30] sm:$0xf]
        %v727 = vld [vmem:[#allocation5 + $0x34] sm:$0xf]
        %v728 = vld [vmem:[#allocation5 + $0x38] sm:$0xf]
        %v729 = vld [vmem:[#allocation5 + $0x3c] sm:$0xf]
        %v730 = vld [vmem:[%s3] sm:$0x1]
        %v732 = vperm.slane %v730, 0
        %v742 = vunpack.c.l.b16 %v698
        %v743 = vunpack.c.l.b16 %v699
        %v744 = vunpack.c.l.b16 %v700
        %v745 = vunpack.c.l.b16 %v701
        %v746 = vunpack.c.l.b16 %v702
        %v747 = vunpack.c.l.b16 %v703
        %v748 = vunpack.c.l.b16 %v704
        %v749 = vunpack.c.l.b16 %v705
        %v750 = vpack.c.b16 %v743, %v742
        %v751 = vpack.c.b16 %v745, %v744
        %v752 = vpack.c.b16 %v747, %v746
        %v753 = vpack.c.b16 %v749, %v748
        %v774 = vunpack.c.l.b16 %v714
        %v775 = vunpack.c.l.b16 %v715
        %v776 = vunpack.c.l.b16 %v716
        %v777 = vunpack.c.l.b16 %v717
        %v778 = vunpack.c.l.b16 %v718
        %v779 = vunpack.c.l.b16 %v719
        %v780 = vunpack.c.l.b16 %v720
        %v781 = vunpack.c.l.b16 %v721
        %v782 = vunpack.c.l.b16 %v722
        %v783 = vunpack.c.l.b16 %v723
        %v784 = vunpack.c.l.b16 %v724
        %v785 = vunpack.c.l.b16 %v725
        %v786 = vunpack.c.l.b16 %v726
        %v787 = vunpack.c.l.b16 %v727
        %v788 = vunpack.c.l.b16 %v728
        %v789 = vunpack.c.l.b16 %v729
        %v790 = vpack.c.b16 %v775, %v774
        %v791 = vpack.c.b16 %v777, %v776
        %v792 = vpack.c.b16 %v779, %v778
        %v793 = vpack.c.b16 %v781, %v780
        %v794 = vpack.c.b16 %v783, %v782
        %v795 = vpack.c.b16 %v785, %v784
        %v796 = vpack.c.b16 %v787, %v786
        %v797 = vpack.c.b16 %v789, %v788
        %806 = vmatpush.bf16.msra.mxu0 %v797
        %807 = vmatpush.bf16.msra.mxu0 %v796
        %808 = vmatpush.bf16.msra.mxu0 %v795
        %809 = vmatpush.bf16.msra.mxu0 %v794
        %810 = vmatpush.bf16.msra.mxu0 %v793
        %811 = vmatpush.bf16.msra.mxu0 %v792
        %812 = vmatpush.bf16.msra.mxu0 %v791
        %813 = vmatpush.bf16.msra.mxu0 %v790
        %814 = vmatmul.bf16.gmra.mxu0 %v750
        %v815 = vpop.f32.mrf.mxu0
        %v816 = vadd.f32 %v732, %v815
        %v817 = vpop.f32.mrf.mxu0
        %v818 = vadd.f32 %v732, %v817
        %819 = vmatmul.bf16.gmra.mxu0 %v751
        %v820 = vpop.f32.mrf.mxu0
        %v821 = vadd.f32 %v732, %v820
        %v822 = vpop.f32.mrf.mxu0
        %v823 = vadd.f32 %v732, %v822
        %824 = vmatmul.bf16.gmra.mxu0 %v752
        %v825 = vpop.f32.mrf.mxu0
        %v826 = vadd.f32 %v732, %v825
        %v827 = vpop.f32.mrf.mxu0
        %v828 = vadd.f32 %v732, %v827
        %829 = vmatmul.bf16.gmra.mxu0 %v753
        %v830 = vpop.f32.mrf.mxu0
        %v831 = vadd.f32 %v732, %v830
        %v832 = vpop.f32.mrf.mxu0
        %v833 = vadd.f32 %v732, %v832
        %834 = vdwg.mxu0
        %v835 = vld [vmem:[%s4] sm:$0x1]
        %v836 = vld [vmem:[%s5] sm:$0x1]
        %837 = vadd.xlane.f32.xlu0 %v816
        %v838 = vpop.xlane.xlu0 %837
        %839 = vadd.xlane.f32.xlu0 %v818
        %v840 = vpop.xlane.xlu0 %839
        %841 = vadd.xlane.f32.xlu0 %v821
        %v842 = vpop.xlane.xlu0 %841
        %843 = vadd.xlane.f32.xlu0 %v823
        %v844 = vpop.xlane.xlu0 %843
        %845 = vadd.xlane.f32.xlu0 %v826
        %v846 = vpop.xlane.xlu0 %845
        %847 = vadd.xlane.f32.xlu0 %v828
        %v848 = vpop.xlane.xlu0 %847
        %849 = vadd.xlane.f32.xlu0 %v831
        %v850 = vpop.xlane.xlu0 %849
        %851 = vadd.xlane.f32.xlu0 %v833
        %v852 = vpop.xlane.xlu0 %851
        %v853 = vrcp.pop 128.0
        %v854 = vmul.f32 128.0, %v853
        %v855 = vsub.f32 1.0, %v854
        %v856 = vmul.f32 %v853, %v855
        %v857 = vadd.f32 %v853, %v856
        %vm858 = vweird.f32 %v853
        %v859 = vsel %vm858, %v853, %v857
        %v860 = vmul.f32 %v838, %v859
        %v861 = vmul.f32 %v840, %v859
        %v862 = vmul.f32 %v842, %v859
        %v863 = vmul.f32 %v844, %v859
        %v864 = vmul.f32 %v846, %v859
        %v865 = vmul.f32 %v848, %v859
        %v866 = vmul.f32 %v850, %v859
        %v867 = vmul.f32 %v852, %v859
        %v868 = vsub.f32 %v816, %v860
        %v869 = vsub.f32 %v818, %v861
        %v870 = vsub.f32 %v821, %v862
        %v871 = vsub.f32 %v823, %v863
        %v872 = vsub.f32 %v826, %v864
        %v873 = vsub.f32 %v828, %v865
        %v874 = vsub.f32 %v831, %v866
        %v875 = vsub.f32 %v833, %v867
        %v876 = vmul.f32 %v868, %v868
        %v877 = vmul.f32 %v869, %v869
        %v878 = vmul.f32 %v870, %v870
        %v879 = vmul.f32 %v871, %v871
        %v880 = vmul.f32 %v872, %v872
        %v881 = vmul.f32 %v873, %v873
        %v882 = vmul.f32 %v874, %v874
        %v883 = vmul.f32 %v875, %v875
        %884 = vadd.xlane.f32.xlu0 %v876
        %v885 = vpop.xlane.xlu0 %884
        %886 = vadd.xlane.f32.xlu0 %v877
        %v887 = vpop.xlane.xlu0 %886
        %888 = vadd.xlane.f32.xlu0 %v878
        %v889 = vpop.xlane.xlu0 %888
        %890 = vadd.xlane.f32.xlu0 %v879
        %v891 = vpop.xlane.xlu0 %890
        %892 = vadd.xlane.f32.xlu0 %v880
        %v893 = vpop.xlane.xlu0 %892
        %894 = vadd.xlane.f32.xlu0 %v881
        %v895 = vpop.xlane.xlu0 %894
        %896 = vadd.xlane.f32.xlu0 %v882
        %v897 = vpop.xlane.xlu0 %896
        %898 = vadd.xlane.f32.xlu0 %v883
        %v899 = vpop.xlane.xlu0 %898
        %v900 = vmul.f32 %v885, %v859
        %v901 = vmul.f32 %v887, %v859
        %v902 = vmul.f32 %v889, %v859
        %v903 = vmul.f32 %v891, %v859
        %v904 = vmul.f32 %v893, %v859
        %v905 = vmul.f32 %v895, %v859
        %v906 = vmul.f32 %v897, %v859
        %v907 = vmul.f32 %v899, %v859
        %v908 = vadd.f32 %v900, 1e-12
        %v909 = vadd.f32 %v901, 1e-12
        %v910 = vadd.f32 %v902, 1e-12
        %v911 = vadd.f32 %v903, 1e-12
        %v912 = vadd.f32 %v904, 1e-12
        %v913 = vadd.f32 %v905, 1e-12
        %v914 = vadd.f32 %v906, 1e-12
        %v915 = vadd.f32 %v907, 1e-12
        %v916 = vrsqrt.pop %v908
        %v917 = vmul.f32 %v916, %v908
        %v918 = vmul.f32 %v917, %v916
        %v919 = vmul.f32 0.5, %v918
        %v920 = vsub.f32 1.5, %v919
        %v921 = vmul.f32 %v916, %v920
        %vm922 = vweird.f32 %v908
        %vm923 = vweird.f32 %v916
        %vm924 = vmor %vm922, %vm923
        %v925 = vsel %vm924, %v916, %v921
        %v926 = vrsqrt.pop %v909
        %v927 = vmul.f32 %v926, %v909
        %v928 = vmul.f32 %v927, %v926
        %v929 = vmul.f32 0.5, %v928
        %v930 = vsub.f32 1.5, %v929
        %v931 = vmul.f32 %v926, %v930
        %vm932 = vweird.f32 %v909
        %vm933 = vweird.f32 %v926
        %vm934 = vmor %vm932, %vm933
        %v935 = vsel %vm934, %v926, %v931
        %v936 = vrsqrt.pop %v910
        %v937 = vmul.f32 %v936, %v910
        %v938 = vmul.f32 %v937, %v936
        %v939 = vmul.f32 0.5, %v938
        %v940 = vsub.f32 1.5, %v939
        %v941 = vmul.f32 %v936, %v940
        %vm942 = vweird.f32 %v910
        %vm943 = vweird.f32 %v936
        %vm944 = vmor %vm942, %vm943
        %v945 = vsel %vm944, %v936, %v941
        %v946 = vrsqrt.pop %v911
        %v947 = vmul.f32 %v946, %v911
        %v948 = vmul.f32 %v947, %v946
        %v949 = vmul.f32 0.5, %v948
        %v950 = vsub.f32 1.5, %v949
        %v951 = vmul.f32 %v946, %v950
        %vm952 = vweird.f32 %v911
        %vm953 = vweird.f32 %v946
        %vm954 = vmor %vm952, %vm953
        %v955 = vsel %vm954, %v946, %v951
        %v956 = vrsqrt.pop %v912
        %v957 = vmul.f32 %v956, %v912
        %v958 = vmul.f32 %v957, %v956
        %v959 = vmul.f32 0.5, %v958
        %v960 = vsub.f32 1.5, %v959
        %v961 = vmul.f32 %v956, %v960
        %vm962 = vweird.f32 %v912
        %vm963 = vweird.f32 %v956
        %vm964 = vmor %vm962, %vm963
        %v965 = vsel %vm964, %v956, %v961
        %v966 = vrsqrt.pop %v913
        %v967 = vmul.f32 %v966, %v913
        %v968 = vmul.f32 %v967, %v966
        %v969 = vmul.f32 0.5, %v968
        %v970 = vsub.f32 1.5, %v969
        %v971 = vmul.f32 %v966, %v970
        %vm972 = vweird.f32 %v913
        %vm973 = vweird.f32 %v966
        %vm974 = vmor %vm972, %vm973
        %v975 = vsel %vm974, %v966, %v971
        %v976 = vrsqrt.pop %v914
        %v977 = vmul.f32 %v976, %v914
        %v978 = vmul.f32 %v977, %v976
        %v979 = vmul.f32 0.5, %v978
        %v980 = vsub.f32 1.5, %v979
        %v981 = vmul.f32 %v976, %v980
        %vm982 = vweird.f32 %v914
        %vm983 = vweird.f32 %v976
        %vm984 = vmor %vm982, %vm983
        %v985 = vsel %vm984, %v976, %v981
        %v986 = vrsqrt.pop %v915
        %v987 = vmul.f32 %v986, %v915
        %v988 = vmul.f32 %v987, %v986
        %v989 = vmul.f32 0.5, %v988
        %v990 = vsub.f32 1.5, %v989
        %v991 = vmul.f32 %v986, %v990
        %vm992 = vweird.f32 %v915
        %vm993 = vweird.f32 %v986
        %vm994 = vmor %vm992, %vm993
        %v995 = vsel %vm994, %v986, %v991
        %v996 = vmul.f32 %v868, %v925
        %v997 = vmul.f32 %v869, %v935
        %v998 = vmul.f32 %v870, %v945
        %v999 = vmul.f32 %v871, %v955
        %v1000 = vmul.f32 %v872, %v965
        %v1001 = vmul.f32 %v873, %v975
        %v1002 = vmul.f32 %v874, %v985
        %v1003 = vmul.f32 %v875, %v995
        %v1005 = vperm.slane %v835, 0
        %v1007 = vmul.f32 %v996, %v1005
        %v1008 = vmul.f32 %v997, %v1005
        %v1009 = vmul.f32 %v998, %v1005
        %v1010 = vmul.f32 %v999, %v1005
        %v1011 = vmul.f32 %v1000, %v1005
        %v1012 = vmul.f32 %v1001, %v1005
        %v1013 = vmul.f32 %v1002, %v1005
        %v1014 = vmul.f32 %v1003, %v1005
        %v1016 = vperm.slane %v836, 0
        %v1018 = vadd.f32 %v1007, %v1016
        %v1019 = vadd.f32 %v1008, %v1016
        %v1020 = vadd.f32 %v1009, %v1016
        %v1021 = vadd.f32 %v1010, %v1016
        %v1022 = vadd.f32 %v1011, %v1016
        %v1023 = vadd.f32 %v1012, %v1016
        %v1024 = vadd.f32 %v1013, %v1016
        %v1025 = vadd.f32 %v1014, %v1016
        %v1026 = vld [vmem:[%s6] sm:$0xf]
        %1028 = vset.pattern.permute.xlu0 0
        %1029 = vperm.xlu0 %1028, %v706
        %v1030 = vpop.permute.xlu0 %1029
        %1033 = vset.pattern.permute.xlu0 0
        %1034 = vperm.xlu0 %1033, %v707
        %v1035 = vpop.permute.xlu0 %1034
        %1038 = vset.pattern.permute.xlu0 0
        %1039 = vperm.xlu0 %1038, %v708
        %v1040 = vpop.permute.xlu0 %1039
        %1043 = vset.pattern.permute.xlu0 0
        %1044 = vperm.xlu0 %1043, %v709
        %v1045 = vpop.permute.xlu0 %1044
        %1048 = vset.pattern.permute.xlu0 0
        %1049 = vperm.xlu0 %1048, %v710
        %v1050 = vpop.permute.xlu0 %1049
        %1053 = vset.pattern.permute.xlu0 0
        %1054 = vperm.xlu0 %1053, %v711
        %v1055 = vpop.permute.xlu0 %1054
        %1058 = vset.pattern.permute.xlu0 0
        %1059 = vperm.xlu0 %1058, %v712
        %v1060 = vpop.permute.xlu0 %1059
        %1063 = vset.pattern.permute.xlu0 0
        %1064 = vperm.xlu0 %1063, %v713
        %v1065 = vpop.permute.xlu0 %1064
        %v1067 = vperm.slane %v1026, 0
        %v1068 = vmul.f32 %v1030, %v1067
        %v1069 = vmul.f32 %v1035, %v1067
        %v1070 = vmul.f32 %v1040, %v1067
        %v1071 = vmul.f32 %v1045, %v1067
        %v1072 = vmul.f32 %v1050, %v1067
        %v1073 = vmul.f32 %v1055, %v1067
        %v1074 = vmul.f32 %v1060, %v1067
        %v1075 = vmul.f32 %v1065, %v1067
        %1076 = vset.pattern.permute.xlu0 1
        %1077 = vperm.xlu0 %1076, %v706
        %v1078 = vpop.permute.xlu0 %1077
        %1080 = vset.pattern.permute.xlu0 1
        %1081 = vperm.xlu0 %1080, %v707
        %v1082 = vpop.permute.xlu0 %1081
        %1084 = vset.pattern.permute.xlu0 1
        %1085 = vperm.xlu0 %1084, %v708
        %v1086 = vpop.permute.xlu0 %1085
        %1088 = vset.pattern.permute.xlu0 1
        %1089 = vperm.xlu0 %1088, %v709
        %v1090 = vpop.permute.xlu0 %1089
        %1092 = vset.pattern.permute.xlu0 1
        %1093 = vperm.xlu0 %1092, %v710
        %v1094 = vpop.permute.xlu0 %1093
        %1096 = vset.pattern.permute.xlu0 1
        %1097 = vperm.xlu0 %1096, %v711
        %v1098 = vpop.permute.xlu0 %1097
        %1100 = vset.pattern.permute.xlu0 1
        %1101 = vperm.xlu0 %1100, %v712
        %v1102 = vpop.permute.xlu0 %1101
        %1104 = vset.pattern.permute.xlu0 1
        %1105 = vperm.xlu0 %1104, %v713
        %v1106 = vpop.permute.xlu0 %1105
        %v1108 = vperm.slane %v1026, 1
        %v1109 = vmul.f32 %v1078, %v1108
        %v1110 = vmul.f32 %v1082, %v1108
        %v1111 = vmul.f32 %v1086, %v1108
        %v1112 = vmul.f32 %v1090, %v1108
        %v1113 = vmul.f32 %v1094, %v1108
        %v1114 = vmul.f32 %v1098, %v1108
        %v1115 = vmul.f32 %v1102, %v1108
        %v1116 = vmul.f32 %v1106, %v1108
        %v1117 = vadd.f32 %v1068, %v1109
        %v1118 = vadd.f32 %v1069, %v1110
        %v1119 = vadd.f32 %v1070, %v1111
        %v1120 = vadd.f32 %v1071, %v1112
        %v1121 = vadd.f32 %v1072, %v1113
        %v1122 = vadd.f32 %v1073, %v1114
        %v1123 = vadd.f32 %v1074, %v1115
        %v1124 = vadd.f32 %v1075, %v1116
        %1125 = vset.pattern.permute.xlu0 2
        %1126 = vperm.xlu0 %1125, %v706
        %v1127 = vpop.permute.xlu0 %1126
        %1129 = vset.pattern.permute.xlu0 2
        %1130 = vperm.xlu0 %1129, %v707
        %v1131 = vpop.permute.xlu0 %1130
        %1133 = vset.pattern.permute.xlu0 2
        %1134 = vperm.xlu0 %1133, %v708
        %v1135 = vpop.permute.xlu0 %1134
        %1137 = vset.pattern.permute.xlu0 2
        %1138 = vperm.xlu0 %1137, %v709
        %v1139 = vpop.permute.xlu0 %1138
        %1141 = vset.pattern.permute.xlu0 2
        %1142 = vperm.xlu0 %1141, %v710
        %v1143 = vpop.permute.xlu0 %1142
        %1145 = vset.pattern.permute.xlu0 2
        %1146 = vperm.xlu0 %1145, %v711
        %v1147 = vpop.permute.xlu0 %1146
        %1149 = vset.pattern.permute.xlu0 2
        %1150 = vperm.xlu0 %1149, %v712
        %v1151 = vpop.permute.xlu0 %1150
        %1153 = vset.pattern.permute.xlu0 2
        %1154 = vperm.xlu0 %1153, %v713
        %v1155 = vpop.permute.xlu0 %1154
        %v1157 = vperm.slane %v1026, 2
        %v1158 = vmul.f32 %v1127, %v1157
        %v1159 = vmul.f32 %v1131, %v1157
        %v1160 = vmul.f32 %v1135, %v1157
        %v1161 = vmul.f32 %v1139, %v1157
        %v1162 = vmul.f32 %v1143, %v1157
        %v1163 = vmul.f32 %v1147, %v1157
        %v1164 = vmul.f32 %v1151, %v1157
        %v1165 = vmul.f32 %v1155, %v1157
        %v1166 = vadd.f32 %v1117, %v1158
        %v1167 = vadd.f32 %v1118, %v1159
        %v1168 = vadd.f32 %v1119, %v1160
        %v1169 = vadd.f32 %v1120, %v1161
        %v1170 = vadd.f32 %v1121, %v1162
        %v1171 = vadd.f32 %v1122, %v1163
        %v1172 = vadd.f32 %v1123, %v1164
        %v1173 = vadd.f32 %v1124, %v1165
        %1174 = vset.pattern.permute.xlu0 3
        %1175 = vperm.xlu0 %1174, %v706
        %v1176 = vpop.permute.xlu0 %1175
        %1178 = vset.pattern.permute.xlu0 3
        %1179 = vperm.xlu0 %1178, %v707
        %v1180 = vpop.permute.xlu0 %1179
        %1182 = vset.pattern.permute.xlu0 3
        %1183 = vperm.xlu0 %1182, %v708
        %v1184 = vpop.permute.xlu0 %1183
        %1186 = vset.pattern.permute.xlu0 3
        %1187 = vperm.xlu0 %1186, %v709
        %v1188 = vpop.permute.xlu0 %1187
        %1190 = vset.pattern.permute.xlu0 3
        %1191 = vperm.xlu0 %1190, %v710
        %v1192 = vpop.permute.xlu0 %1191
        %1194 = vset.pattern.permute.xlu0 3
        %1195 = vperm.xlu0 %1194, %v711
        %v1196 = vpop.permute.xlu0 %1195
        %1198 = vset.pattern.permute.xlu0 3
        %1199 = vperm.xlu0 %1198, %v712
        %v1200 = vpop.permute.xlu0 %1199
        %1202 = vset.pattern.permute.xlu0 3
        %1203 = vperm.xlu0 %1202, %v713
        %v1204 = vpop.permute.xlu0 %1203
        %v1206 = vperm.slane %v1026, 3
        %v1207 = vmul.f32 %v1176, %v1206
        %v1208 = vmul.f32 %v1180, %v1206
        %v1209 = vmul.f32 %v1184, %v1206
        %v1210 = vmul.f32 %v1188, %v1206
        %v1211 = vmul.f32 %v1192, %v1206
        %v1212 = vmul.f32 %v1196, %v1206
        %v1213 = vmul.f32 %v1200, %v1206
        %v1214 = vmul.f32 %v1204, %v1206
        %v1215 = vadd.f32 %v1166, %v1207
        %v1216 = vadd.f32 %v1167, %v1208
        %v1217 = vadd.f32 %v1168, %v1209
        %v1218 = vadd.f32 %v1169, %v1210
        %v1219 = vadd.f32 %v1170, %v1211
        %v1220 = vadd.f32 %v1171, %v1212
        %v1221 = vadd.f32 %v1172, %v1213
        %v1222 = vadd.f32 %v1173, %v1214
        %v1223 = vld [vmem:[%s7] sm:$0x1]
        %v1225 = vperm.slane %v1223, 0
        %v1227 = vadd.f32 %v1215, %v1225
        %v1228 = vadd.f32 %v1216, %v1225
        %v1229 = vadd.f32 %v1217, %v1225
        %v1230 = vadd.f32 %v1218, %v1225
        %v1231 = vadd.f32 %v1219, %v1225
        %v1232 = vadd.f32 %v1220, %v1225
        %v1233 = vadd.f32 %v1221, %v1225
        %v1234 = vadd.f32 %v1222, %v1225
        %v1235 = vld [vmem:[%s8] sm:$0x1]
        %v1236 = vld [vmem:[#allocation7] sm:$0x1]
        %1237 = vadd.xlane.f32.xlu0 %v1227
        %v1238 = vpop.xlane.xlu0 %1237
        %1239 = vadd.xlane.f32.xlu0 %v1228
        %v1240 = vpop.xlane.xlu0 %1239
        %1241 = vadd.xlane.f32.xlu0 %v1229
        %v1242 = vpop.xlane.xlu0 %1241
        %1243 = vadd.xlane.f32.xlu0 %v1230
        %v1244 = vpop.xlane.xlu0 %1243
        %1245 = vadd.xlane.f32.xlu0 %v1231
        %v1246 = vpop.xlane.xlu0 %1245
        %1247 = vadd.xlane.f32.xlu0 %v1232
        %v1248 = vpop.xlane.xlu0 %1247
        %1249 = vadd.xlane.f32.xlu0 %v1233
        %v1250 = vpop.xlane.xlu0 %1249
        %1251 = vadd.xlane.f32.xlu0 %v1234
        %v1252 = vpop.xlane.xlu0 %1251
        %v1253 = vmul.f32 %v1238, %v859
        %v1254 = vmul.f32 %v1240, %v859
        %v1255 = vmul.f32 %v1242, %v859
        %v1256 = vmul.f32 %v1244, %v859
        %v1257 = vmul.f32 %v1246, %v859
        %v1258 = vmul.f32 %v1248, %v859
        %v1259 = vmul.f32 %v1250, %v859
        %v1260 = vmul.f32 %v1252, %v859
        %v1261 = vsub.f32 %v1227, %v1253
        %v1262 = vsub.f32 %v1228, %v1254
        %v1263 = vsub.f32 %v1229, %v1255
        %v1264 = vsub.f32 %v1230, %v1256
        %v1265 = vsub.f32 %v1231, %v1257
        %v1266 = vsub.f32 %v1232, %v1258
        %v1267 = vsub.f32 %v1233, %v1259
        %v1268 = vsub.f32 %v1234, %v1260
        %v1269 = vmul.f32 %v1261, %v1261
        %v1270 = vmul.f32 %v1262, %v1262
        %v1271 = vmul.f32 %v1263, %v1263
        %v1272 = vmul.f32 %v1264, %v1264
        %v1273 = vmul.f32 %v1265, %v1265
        %v1274 = vmul.f32 %v1266, %v1266
        %v1275 = vmul.f32 %v1267, %v1267
        %v1276 = vmul.f32 %v1268, %v1268
        %1277 = vadd.xlane.f32.xlu0 %v1269
        %v1278 = vpop.xlane.xlu0 %1277
        %1279 = vadd.xlane.f32.xlu0 %v1270
        %v1280 = vpop.xlane.xlu0 %1279
        %1281 = vadd.xlane.f32.xlu0 %v1271
        %v1282 = vpop.xlane.xlu0 %1281
        %1283 = vadd.xlane.f32.xlu0 %v1272
        %v1284 = vpop.xlane.xlu0 %1283
        %1285 = vadd.xlane.f32.xlu0 %v1273
        %v1286 = vpop.xlane.xlu0 %1285
        %1287 = vadd.xlane.f32.xlu0 %v1274
        %v1288 = vpop.xlane.xlu0 %1287
        %1289 = vadd.xlane.f32.xlu0 %v1275
        %v1290 = vpop.xlane.xlu0 %1289
        %1291 = vadd.xlane.f32.xlu0 %v1276
        %v1292 = vpop.xlane.xlu0 %1291
        %v1293 = vmul.f32 %v1278, %v859
        %v1294 = vmul.f32 %v1280, %v859
        %v1295 = vmul.f32 %v1282, %v859
        %v1296 = vmul.f32 %v1284, %v859
        %v1297 = vmul.f32 %v1286, %v859
        %v1298 = vmul.f32 %v1288, %v859
        %v1299 = vmul.f32 %v1290, %v859
        %v1300 = vmul.f32 %v1292, %v859
        %v1301 = vadd.f32 %v1293, 1e-12
        %v1302 = vadd.f32 %v1294, 1e-12
        %v1303 = vadd.f32 %v1295, 1e-12
        %v1304 = vadd.f32 %v1296, 1e-12
        %v1305 = vadd.f32 %v1297, 1e-12
        %v1306 = vadd.f32 %v1298, 1e-12
        %v1307 = vadd.f32 %v1299, 1e-12
        %v1308 = vadd.f32 %v1300, 1e-12
        %v1309 = vrsqrt.pop %v1301
        %v1310 = vmul.f32 %v1309, %v1301
        %v1311 = vmul.f32 %v1310, %v1309
        %v1312 = vmul.f32 0.5, %v1311
        %v1313 = vsub.f32 1.5, %v1312
        %v1314 = vmul.f32 %v1309, %v1313
        %vm1315 = vweird.f32 %v1301
        %vm1316 = vweird.f32 %v1309
        %vm1317 = vmor %vm1315, %vm1316
        %v1318 = vsel %vm1317, %v1309, %v1314
        %v1319 = vrsqrt.pop %v1302
        %v1320 = vmul.f32 %v1319, %v1302
        %v1321 = vmul.f32 %v1320, %v1319
        %v1322 = vmul.f32 0.5, %v1321
        %v1323 = vsub.f32 1.5, %v1322
        %v1324 = vmul.f32 %v1319, %v1323
        %vm1325 = vweird.f32 %v1302
        %vm1326 = vweird.f32 %v1319
        %vm1327 = vmor %vm1325, %vm1326
        %v1328 = vsel %vm1327, %v1319, %v1324
        %v1329 = vrsqrt.pop %v1303
        %v1330 = vmul.f32 %v1329, %v1303
        %v1331 = vmul.f32 %v1330, %v1329
        %v1332 = vmul.f32 0.5, %v1331
        %v1333 = vsub.f32 1.5, %v1332
        %v1334 = vmul.f32 %v1329, %v1333
        %vm1335 = vweird.f32 %v1303
        %vm1336 = vweird.f32 %v1329
        %vm1337 = vmor %vm1335, %vm1336
        %v1338 = vsel %vm1337, %v1329, %v1334
        %v1339 = vrsqrt.pop %v1304
        %v1340 = vmul.f32 %v1339, %v1304
        %v1341 = vmul.f32 %v1340, %v1339
        %v1342 = vmul.f32 0.5, %v1341
        %v1343 = vsub.f32 1.5, %v1342
        %v1344 = vmul.f32 %v1339, %v1343
        %vm1345 = vweird.f32 %v1304
        %vm1346 = vweird.f32 %v1339
        %vm1347 = vmor %vm1345, %vm1346
        %v1348 = vsel %vm1347, %v1339, %v1344
        %v1349 = vrsqrt.pop %v1305
        %v1350 = vmul.f32 %v1349, %v1305
        %v1351 = vmul.f32 %v1350, %v1349
        %v1352 = vmul.f32 0.5, %v1351
        %v1353 = vsub.f32 1.5, %v1352
        %v1354 = vmul.f32 %v1349, %v1353
        %vm1355 = vweird.f32 %v1305
        %vm1356 = vweird.f32 %v1349
        %vm1357 = vmor %vm1355, %vm1356
        %v1358 = vsel %vm1357, %v1349, %v1354
        %v1359 = vrsqrt.pop %v1306
        %v1360 = vmul.f32 %v1359, %v1306
        %v1361 = vmul.f32 %v1360, %v1359
        %v1362 = vmul.f32 0.5, %v1361
        %v1363 = vsub.f32 1.5, %v1362
        %v1364 = vmul.f32 %v1359, %v1363
        %vm1365 = vweird.f32 %v1306
        %vm1366 = vweird.f32 %v1359
        %vm1367 = vmor %vm1365, %vm1366
        %v1368 = vsel %vm1367, %v1359, %v1364
        %v1369 = vrsqrt.pop %v1307
        %v1370 = vmul.f32 %v1369, %v1307
        %v1371 = vmul.f32 %v1370, %v1369
        %v1372 = vmul.f32 0.5, %v1371
        %v1373 = vsub.f32 1.5, %v1372
        %v1374 = vmul.f32 %v1369, %v1373
        %vm1375 = vweird.f32 %v1307
        %vm1376 = vweird.f32 %v1369
        %vm1377 = vmor %vm1375, %vm1376
        %v1378 = vsel %vm1377, %v1369, %v1374
        %v1379 = vrsqrt.pop %v1308
        %v1380 = vmul.f32 %v1379, %v1308
        %v1381 = vmul.f32 %v1380, %v1379
        %v1382 = vmul.f32 0.5, %v1381
        %v1383 = vsub.f32 1.5, %v1382
        %v1384 = vmul.f32 %v1379, %v1383
        %vm1385 = vweird.f32 %v1308
        %vm1386 = vweird.f32 %v1379
        %vm1387 = vmor %vm1385, %vm1386
        %v1388 = vsel %vm1387, %v1379, %v1384
        %v1389 = vmul.f32 %v1261, %v1318
        %v1390 = vmul.f32 %v1262, %v1328
        %v1391 = vmul.f32 %v1263, %v1338
        %v1392 = vmul.f32 %v1264, %v1348
        %v1393 = vmul.f32 %v1265, %v1358
        %v1394 = vmul.f32 %v1266, %v1368
        %v1395 = vmul.f32 %v1267, %v1378
        %v1396 = vmul.f32 %v1268, %v1388
        %v1398 = vperm.slane %v1235, 0
        %v1400 = vmul.f32 %v1389, %v1398
        %v1401 = vmul.f32 %v1390, %v1398
        %v1402 = vmul.f32 %v1391, %v1398
        %v1403 = vmul.f32 %v1392, %v1398
        %v1404 = vmul.f32 %v1393, %v1398
        %v1405 = vmul.f32 %v1394, %v1398
        %v1406 = vmul.f32 %v1395, %v1398
        %v1407 = vmul.f32 %v1396, %v1398
        %v1409 = vperm.slane %v1236, 0
        %v1411 = vadd.f32 %v1400, %v1409
        %v1412 = vadd.f32 %v1401, %v1409
        %v1413 = vadd.f32 %v1402, %v1409
        %v1414 = vadd.f32 %v1403, %v1409
        %v1415 = vadd.f32 %v1404, %v1409
        %v1416 = vadd.f32 %v1405, %v1409
        %v1417 = vadd.f32 %v1406, %v1409
        %v1418 = vadd.f32 %v1407, %v1409
        %v1419 = vadd.f32 %v1018, %v1411
        %v1420 = vadd.f32 %v1019, %v1412
        %v1421 = vadd.f32 %v1020, %v1413
        %v1422 = vadd.f32 %v1021, %v1414
        %v1423 = vadd.f32 %v1022, %v1415
        %v1424 = vadd.f32 %v1023, %v1416
        %v1425 = vadd.f32 %v1024, %v1417
        %v1426 = vadd.f32 %v1025, %v1418
        %v1427 = vrot.slane %v1419, 4
        %v1428 = vadd.f32 %v1419, %v1427
        %v1429 = vrot.slane %v1428, 2
        %v1430 = vadd.f32 %v1428, %v1429
        %v1431 = vrot.slane %v1430, 1
        %v1432 = vadd.f32 %v1430, %v1431
        %v1433 = vrot.slane %v1420, 4
        %v1434 = vadd.f32 %v1420, %v1433
        %v1435 = vrot.slane %v1434, 2
        %v1436 = vadd.f32 %v1434, %v1435
        %v1437 = vrot.slane %v1436, 1
        %v1438 = vadd.f32 %v1436, %v1437
        %v1439 = vrot.slane %v1421, 4
        %v1440 = vadd.f32 %v1421, %v1439
        %v1441 = vrot.slane %v1440, 2
        %v1442 = vadd.f32 %v1440, %v1441
        %v1443 = vrot.slane %v1442, 1
        %v1444 = vadd.f32 %v1442, %v1443
        %v1445 = vrot.slane %v1422, 4
        %v1446 = vadd.f32 %v1422, %v1445
        %v1447 = vrot.slane %v1446, 2
        %v1448 = vadd.f32 %v1446, %v1447
        %v1449 = vrot.slane %v1448, 1
        %v1450 = vadd.f32 %v1448, %v1449
        %v1451 = vrot.slane %v1423, 4
        %v1452 = vadd.f32 %v1423, %v1451
        %v1453 = vrot.slane %v1452, 2
        %v1454 = vadd.f32 %v1452, %v1453
        %v1455 = vrot.slane %v1454, 1
        %v1456 = vadd.f32 %v1454, %v1455
        %v1457 = vrot.slane %v1424, 4
        %v1458 = vadd.f32 %v1424, %v1457
        %v1459 = vrot.slane %v1458, 2
        %v1460 = vadd.f32 %v1458, %v1459
        %v1461 = vrot.slane %v1460, 1
        %v1462 = vadd.f32 %v1460, %v1461
        %v1463 = vrot.slane %v1425, 4
        %v1464 = vadd.f32 %v1425, %v1463
        %v1465 = vrot.slane %v1464, 2
        %v1466 = vadd.f32 %v1464, %v1465
        %v1467 = vrot.slane %v1466, 1
        %v1468 = vadd.f32 %v1466, %v1467
        %v1469 = vrot.slane %v1426, 4
        %v1470 = vadd.f32 %v1426, %v1469
        %v1471 = vrot.slane %v1470, 2
        %v1472 = vadd.f32 %v1470, %v1471
        %v1473 = vrot.slane %v1472, 1
        %v1474 = vadd.f32 %v1472, %v1473
        %v1475 = vmul.f32 %v1432, 0.0625
        %v1476 = vmul.f32 %v1438, 0.0625
        %v1477 = vmul.f32 %v1444, 0.0625
        %v1478 = vmul.f32 %v1450, 0.0625
        %v1479 = vmul.f32 %v1456, 0.0625
        %v1480 = vmul.f32 %v1462, 0.0625
        %v1481 = vmul.f32 %v1468, 0.0625
        %v1482 = vmul.f32 %v1474, 0.0625
        %v1483 = vpack.c.bf16 %v1475, %v1475
        %v1484 = vpack.c.bf16 %v1476, %v1476
        %v1485 = vpack.c.bf16 %v1477, %v1477
        %v1486 = vpack.c.bf16 %v1478, %v1478
        %v1487 = vpack.c.bf16 %v1479, %v1479
        %v1488 = vpack.c.bf16 %v1480, %v1480
        %v1489 = vpack.c.bf16 %v1481, %v1481
        %v1490 = vpack.c.bf16 %v1482, %v1482
        %v1491 = vld [vmem:[#allocation8] sm:$0xf]
        %v1492 = vld [vmem:[#allocation8 + $0x4] sm:$0xf]
        %v1493 = vld [vmem:[#allocation8 + $0x8] sm:$0xf]
        %v1494 = vld [vmem:[#allocation8 + $0xc] sm:$0xf]
        %v1495 = vld [vmem:[#allocation8 + $0x10] sm:$0xf]
        %v1496 = vld [vmem:[#allocation8 + $0x14] sm:$0xf]
        %v1497 = vld [vmem:[#allocation8 + $0x18] sm:$0xf]
        %v1498 = vld [vmem:[#allocation8 + $0x1c] sm:$0xf]
        %v1499 = vld [vmem:[#allocation8 + $0x20] sm:$0xf]
        %v1500 = vld [vmem:[#allocation8 + $0x24] sm:$0xf]
        %v1501 = vld [vmem:[#allocation8 + $0x28] sm:$0xf]
        %v1502 = vld [vmem:[#allocation8 + $0x2c] sm:$0xf]
        %v1503 = vld [vmem:[#allocation8 + $0x30] sm:$0xf]
        %v1504 = vld [vmem:[#allocation8 + $0x34] sm:$0xf]
        %v1505 = vld [vmem:[#allocation8 + $0x38] sm:$0xf]
        %v1506 = vld [vmem:[#allocation8 + $0x3c] sm:$0xf]
        %v1507 = vld [vmem:[#allocation10] sm:$0x1]
        %v1509 = vperm.slane %v1507, 0
        %v1519 = vunpack.c.l.b16 %v1483
        %v1520 = vunpack.c.l.b16 %v1484
        %v1521 = vunpack.c.l.b16 %v1485
        %v1522 = vunpack.c.l.b16 %v1486
        %v1523 = vunpack.c.l.b16 %v1487
        %v1524 = vunpack.c.l.b16 %v1488
        %v1525 = vunpack.c.l.b16 %v1489
        %v1526 = vunpack.c.l.b16 %v1490
        %vm1527 = vcmask 1041409
        %v1528 = vsel %vm1527, %v1520, %v1519
        %vm1529 = vcmask 1042434
        %v1530 = vsel %vm1529, %v1521, %v1528
        %vm1531 = vcmask 1043459
        %v1532 = vsel %vm1531, %v1522, %v1530
        %vm1533 = vcmask 1044484
        %v1534 = vsel %vm1533, %v1523, %v1532
        %vm1535 = vcmask 1045509
        %v1536 = vsel %vm1535, %v1524, %v1534
        %vm1537 = vcmask 1046534
        %v1538 = vsel %vm1537, %v1525, %v1536
        %vm1539 = vcmask 1047559
        %v1540 = vsel %vm1539, %v1526, %v1538
        %v1541 = vpack.c.b16 %v1540, %v1540
        %v1559 = vunpack.c.l.b16 %v1491
        %v1560 = vunpack.c.l.b16 %v1492
        %v1561 = vunpack.c.l.b16 %v1493
        %v1562 = vunpack.c.l.b16 %v1494
        %v1563 = vunpack.c.l.b16 %v1495
        %v1564 = vunpack.c.l.b16 %v1496
        %v1565 = vunpack.c.l.b16 %v1497
        %v1566 = vunpack.c.l.b16 %v1498
        %v1567 = vunpack.c.l.b16 %v1499
        %v1568 = vunpack.c.l.b16 %v1500
        %v1569 = vunpack.c.l.b16 %v1501
        %v1570 = vunpack.c.l.b16 %v1502
        %v1571 = vunpack.c.l.b16 %v1503
        %v1572 = vunpack.c.l.b16 %v1504
        %v1573 = vunpack.c.l.b16 %v1505
        %v1574 = vunpack.c.l.b16 %v1506
        %v1575 = vpack.c.b16 %v1560, %v1559
        %v1576 = vpack.c.b16 %v1562, %v1561
        %v1577 = vpack.c.b16 %v1564, %v1563
        %v1578 = vpack.c.b16 %v1566, %v1565
        %v1579 = vpack.c.b16 %v1568, %v1567
        %v1580 = vpack.c.b16 %v1570, %v1569
        %v1581 = vpack.c.b16 %v1572, %v1571
        %v1582 = vpack.c.b16 %v1574, %v1573
        %1591 = vmatpush.bf16.msra.mxu0 %v1582
        %1592 = vmatpush.bf16.msra.mxu0 %v1581
        %1593 = vmatpush.bf16.msra.mxu0 %v1580
        %1594 = vmatpush.bf16.msra.mxu0 %v1579
        %1595 = vmatpush.bf16.msra.mxu0 %v1578
        %1596 = vmatpush.bf16.msra.mxu0 %v1577
        %1597 = vmatpush.bf16.msra.mxu0 %v1576
        %1598 = vmatpush.bf16.msra.mxu0 %v1575
        %1599 = vmatmul.bf16.gmra.mxu0 %v1541
        %v1600 = vpop.f32.mrf.mxu0
        %v1601 = vadd.f32 %v1509, %v1600
        %v1602 = vpop.f32.mrf.mxu0
        %1603 = vdwg.mxu0
        %v1604 = vtanh.pop %v1601
        %v1605 = vpack.c.bf16 %v1604, %v1604
        %v1606 = vld [vmem:[%s12] sm:$0xff]
        %v1607 = vld [vmem:[%s12 + $0x8] sm:$0xff]
        %v1608 = vld [vmem:[%s12 + $0x10] sm:$0xff]
        %v1609 = vld [vmem:[%s12 + $0x18] sm:$0xff]
        %v1610 = vld [vmem:[%s12 + $0x20] sm:$0xff]
        %v1611 = vld [vmem:[%s12 + $0x28] sm:$0xff]
        %v1612 = vld [vmem:[%s12 + $0x30] sm:$0xff]
        %v1613 = vld [vmem:[%s12 + $0x38] sm:$0xff]
        %v1614 = vld [vmem:[%s12 + $0x40] sm:$0xff]
        %v1615 = vld [vmem:[%s12 + $0x48] sm:$0xff]
        %v1616 = vld [vmem:[%s12 + $0x50] sm:$0xff]
        %v1617 = vld [vmem:[%s12 + $0x58] sm:$0xff]
        %v1618 = vld [vmem:[%s12 + $0x60] sm:$0xff]
        %v1619 = vld [vmem:[%s12 + $0x68] sm:$0xff]
        %v1620 = vld [vmem:[%s12 + $0x70] sm:$0xff]
        %v1621 = vld [vmem:[%s12 + $0x78] sm:$0xff]
        %v1622 = vld [vmem:[%s13] sm:$0x3]
        %v1624 = vperm.slane %v1622, 0
        %v1625 = vperm.slane %v1622, 1
        %v1644 = vunpack.c.l.b16 %v1606
        %v1645 = vunpack.c.h.b16 %v1606
        %v1646 = vunpack.c.l.b16 %v1607
        %v1647 = vunpack.c.h.b16 %v1607
        %v1648 = vunpack.c.l.b16 %v1608
        %v1649 = vunpack.c.h.b16 %v1608
        %v1650 = vunpack.c.l.b16 %v1609
        %v1651 = vunpack.c.h.b16 %v1609
        %v1652 = vunpack.c.l.b16 %v1610
        %v1653 = vunpack.c.h.b16 %v1610
        %v1654 = vunpack.c.l.b16 %v1611
        %v1655 = vunpack.c.h.b16 %v1611
        %v1656 = vunpack.c.l.b16 %v1612
        %v1657 = vunpack.c.h.b16 %v1612
        %v1658 = vunpack.c.l.b16 %v1613
        %v1659 = vunpack.c.h.b16 %v1613
        %v1660 = vunpack.c.l.b16 %v1614
        %v1661 = vunpack.c.h.b16 %v1614
        %v1662 = vunpack.c.l.b16 %v1615
        %v1663 = vunpack.c.h.b16 %v1615
        %v1664 = vunpack.c.l.b16 %v1616
        %v1665 = vunpack.c.h.b16 %v1616
        %v1666 = vunpack.c.l.b16 %v1617
        %v1667 = vunpack.c.h.b16 %v1617
        %v1668 = vunpack.c.l.b16 %v1618
        %v1669 = vunpack.c.h.b16 %v1618
        %v1670 = vunpack.c.l.b16 %v1619
        %v1671 = vunpack.c.h.b16 %v1619
        %v1672 = vunpack.c.l.b16 %v1620
        %v1673 = vunpack.c.h.b16 %v1620
        %v1674 = vunpack.c.l.b16 %v1621
        %v1675 = vunpack.c.h.b16 %v1621
        %v1676 = vpack.c.b16 %v1646, %v1644
        %v1677 = vpack.c.b16 %v1647, %v1645
        %v1678 = vpack.c.b16 %v1650, %v1648
        %v1679 = vpack.c.b16 %v1651, %v1649
        %v1680 = vpack.c.b16 %v1654, %v1652
        %v1681 = vpack.c.b16 %v1655, %v1653
        %v1682 = vpack.c.b16 %v1658, %v1656
        %v1683 = vpack.c.b16 %v1659, %v1657
        %v1684 = vpack.c.b16 %v1662, %v1660
        %v1685 = vpack.c.b16 %v1663, %v1661
        %v1686 = vpack.c.b16 %v1666, %v1664
        %v1687 = vpack.c.b16 %v1667, %v1665
        %v1688 = vpack.c.b16 %v1670, %v1668
        %v1689 = vpack.c.b16 %v1671, %v1669
        %v1690 = vpack.c.b16 %v1674, %v1672
        %v1691 = vpack.c.b16 %v1675, %v1673
        %1708 = vmatpush.bf16.msra.mxu0 %v1690
        %1709 = vmatpush.bf16.msra.mxu0 %v1688
        %1710 = vmatpush.bf16.msra.mxu0 %v1686
        %1711 = vmatpush.bf16.msra.mxu0 %v1684
        %1712 = vmatpush.bf16.msra.mxu0 %v1682
        %1713 = vmatpush.bf16.msra.mxu0 %v1680
        %1714 = vmatpush.bf16.msra.mxu0 %v1678
        %1715 = vmatpush.bf16.msra.mxu0 %v1676
        %1716 = vmatmul.bf16.gmra.mxu0 %v1605
        %v1717 = vpop.f32.mrf.mxu0
        %v1718 = vadd.f32 %v1624, %v1717
        %v1719 = vpop.f32.mrf.mxu0
        %1720 = vdwg.mxu0
        %1721 = vmatpush.bf16.msra.mxu0 %v1691
        %1722 = vmatpush.bf16.msra.mxu0 %v1689
        %1723 = vmatpush.bf16.msra.mxu0 %v1687
        %1724 = vmatpush.bf16.msra.mxu0 %v1685
        %1725 = vmatpush.bf16.msra.mxu0 %v1683
        %1726 = vmatpush.bf16.msra.mxu0 %v1681
        %1727 = vmatpush.bf16.msra.mxu0 %v1679
        %1728 = vmatpush.bf16.msra.mxu0 %v1677
        %1729 = vmatmul.bf16.gmra.mxu0 %v1605
        %v1730 = vpop.f32.mrf.mxu0
        %v1731 = vadd.f32 %v1625, %v1730
        %v1732 = vpop.f32.mrf.mxu0
        %1733 = vdwg.mxu0
        %v1734 = vmul.f32 %v1718, 0.5
        %v1735 = vmul.f32 %v1731, 0.5
        %v1736 = vmul.f32 %v1718, 0.70710677
        %v1737 = vmul.f32 %v1731, 0.70710677
        %vm1738 = vcmp.ge.f32.partialorder %v1736, 0.0
        %vm1739 = vcmp.ge.f32.partialorder %v1737, 0.0
        %v1740 = vsel %vm1738, 1.0, -1.0
        %v1741 = vsel %vm1739, 1.0, -1.0
        %v1742 = vand.u32 2147483647, %v1736
        %v1743 = vand.u32 2147483647, %v1737
        %v1744 = vmul.f32 %v1742, 0.3275911
        %v1745 = vmul.f32 %v1743, 0.3275911
        %v1746 = vadd.f32 %v1744, 1.0
        %v1747 = vadd.f32 %v1745, 1.0
        %v1748 = vrcp.pop %v1746
        %v1749 = vmul.f32 %v1746, %v1748
        %v1750 = vsub.f32 1.0, %v1749
        %v1751 = vmul.f32 %v1748, %v1750
        %v1752 = vadd.f32 %v1748, %v1751
        %vm1753 = vweird.f32 %v1746
        %vm1754 = vweird.f32 %v1748
        %vm1755 = vmor %vm1753, %vm1754
        %v1756 = vsel %vm1755, %v1748, %v1752
        %v1757 = vand.u32 2147483647, %v1746
        %vm1758 = vcmp.eq.f32.partialorder %v1757, 8.507059e+37
        %v1759 = vand.u32 %v1746, 2147483648
        %v1760 = vor.u32 1.1754944e-38, %v1759
        %v1761 = vsel %vm1758, %v1760, %v1756
        %v1762 = vmul.f32 1.0, %v1761
        %v1763 = vrcp.pop %v1747
        %v1764 = vmul.f32 %v1747, %v1763
        %v1765 = vsub.f32 1.0, %v1764
        %v1766 = vmul.f32 %v1763, %v1765
        %v1767 = vadd.f32 %v1763, %v1766
        %vm1768 = vweird.f32 %v1747
        %vm1769 = vweird.f32 %v1763
        %vm1770 = vmor %vm1768, %vm1769
        %v1771 = vsel %vm1770, %v1763, %v1767
        %v1772 = vand.u32 2147483647, %v1747
        %vm1773 = vcmp.eq.f32.partialorder %v1772, 8.507059e+37
        %v1774 = vand.u32 %v1747, 2147483648
        %v1775 = vor.u32 1.1754944e-38, %v1774
        %v1776 = vsel %vm1773, %v1775, %v1771
        %v1777 = vmul.f32 1.0, %v1776
        %v1778 = vmul.f32 %v1762, 1.0614054
        %v1779 = vmul.f32 %v1777, 1.0614054
        %v1780 = vadd.f32 %v1778, -1.4531521
        %v1781 = vadd.f32 %v1779, -1.4531521
        %v1782 = vmul.f32 %v1780, %v1762
        %v1783 = vmul.f32 %v1781, %v1777
        %v1784 = vadd.f32 %v1782, 1.4214138
        %v1785 = vadd.f32 %v1783, 1.4214138
        %v1786 = vmul.f32 %v1784, %v1762
        %v1787 = vmul.f32 %v1785, %v1777
        %v1788 = vadd.f32 %v1786, -0.28449672
        %v1789 = vadd.f32 %v1787, -0.28449672
        %v1790 = vmul.f32 %v1788, %v1762
        %v1791 = vmul.f32 %v1789, %v1777
        %v1792 = vadd.f32 %v1790, 0.2548296
        %v1793 = vadd.f32 %v1791, 0.2548296
        %v1794 = vmul.f32 %v1792, %v1762
        %v1795 = vmul.f32 %v1793, %v1777
        %v1796 = vsub.f32 0.0, %v1742
        %v1797 = vsub.f32 0.0, %v1743
        %v1798 = vmul.f32 %v1796, %v1742
        %v1799 = vmul.f32 %v1797, %v1743
        %v1800 = vmul.f32 %v1798, 1.442695
        %v1801 = vpow.pop %v1800
        %v1802 = vmul.f32 %v1799, 1.442695
        %v1803 = vpow.pop %v1802
        %v1804 = vmul.f32 %v1794, %v1801
        %v1805 = vmul.f32 %v1795, %v1803
        %v1806 = vsub.f32 1.0, %v1804
        %v1807 = vsub.f32 1.0, %v1805
        %v1808 = vmul.f32 %v1740, %v1806
        %v1809 = vmul.f32 %v1741, %v1807
        %v1810 = vadd.f32 %v1808, 1.0
        %v1811 = vadd.f32 %v1809, 1.0
        %v1812 = vmul.f32 %v1734, %v1810
        %v1813 = vmul.f32 %v1735, %v1811
        %v1814 = vld [vmem:[%s14] sm:$0x3]
        %v1815 = vld [vmem:[%s15] sm:$0x3]
        %v1816 = vadd.f32 %v1812, %v1813
        %1817 = vadd.xlane.f32.xlu0 %v1816
        %v1818 = vpop.xlane.xlu0 %1817
        %v1819 = vrcp.pop 256.0
        %v1820 = vmul.f32 256.0, %v1819
        %v1821 = vsub.f32 1.0, %v1820
        %v1822 = vmul.f32 %v1819, %v1821
        %v1823 = vadd.f32 %v1819, %v1822
        %vm1824 = vweird.f32 %v1819
        %v1825 = vsel %vm1824, %v1819, %v1823
        %v1826 = vmul.f32 %v1818, %v1825
        %v1827 = vsub.f32 %v1812, %v1826
        %v1828 = vsub.f32 %v1813, %v1826
        %v1829 = vmul.f32 %v1827, %v1827
        %v1830 = vmul.f32 %v1828, %v1828
        %v1831 = vadd.f32 %v1829, %v1830
        %1832 = vadd.xlane.f32.xlu0 %v1831
        %v1833 = vpop.xlane.xlu0 %1832
        %v1834 = vmul.f32 %v1833, %v1825
        %v1835 = vadd.f32 %v1834, 1e-12
        %v1836 = vrsqrt.pop %v1835
        %v1837 = vmul.f32 %v1836, %v1835
        %v1838 = vmul.f32 %v1837, %v1836
        %v1839 = vmul.f32 0.5, %v1838
        %v1840 = vsub.f32 1.5, %v1839
        %v1841 = vmul.f32 %v1836, %v1840
        %vm1842 = vweird.f32 %v1835
        %vm1843 = vweird.f32 %v1836
        %vm1844 = vmor %vm1842, %vm1843
        %v1845 = vsel %vm1844, %v1836, %v1841
        %v1846 = vmul.f32 %v1827, %v1845
        %v1847 = vmul.f32 %v1828, %v1845
        %v1849 = vperm.slane %v1814, 0
        %v1850 = vperm.slane %v1814, 1
        %v1853 = vmul.f32 %v1846, %v1849
        %v1854 = vmul.f32 %v1847, %v1850
        %v1856 = vperm.slane %v1815, 0
        %v1857 = vperm.slane %v1815, 1
        %v1860 = vadd.f32 %v1853, %v1856
        %v1861 = vadd.f32 %v1854, %v1857
        %v1862 = vpack.c.bf16 %v1860, %v1860
        %v1863 = vpack.c.bf16 %v1861, %v1861
        %v1864 = vld [vmem:[#allocation11] sm:$0xf]
        %v1865 = vld [vmem:[#allocation11 + $0x4] sm:$0xf]
        %v1866 = vld [vmem:[#allocation11 + $0x8] sm:$0xf]
        %v1867 = vld [vmem:[#allocation11 + $0xc] sm:$0xf]
        %v1868 = vld [vmem:[#allocation11 + $0x10] sm:$0xf]
        %v1869 = vld [vmem:[#allocation11 + $0x14] sm:$0xf]
        %v1870 = vld [vmem:[#allocation11 + $0x18] sm:$0xf]
        %v1871 = vld [vmem:[#allocation11 + $0x1c] sm:$0xf]
        %v1872 = vld [vmem:[#allocation11 + $0x20] sm:$0xf]
        %v1873 = vld [vmem:[#allocation11 + $0x24] sm:$0xf]
        %v1874 = vld [vmem:[#allocation11 + $0x28] sm:$0xf]
        %v1875 = vld [vmem:[#allocation11 + $0x2c] sm:$0xf]
        %v1876 = vld [vmem:[#allocation11 + $0x30] sm:$0xf]
        %v1877 = vld [vmem:[#allocation11 + $0x34] sm:$0xf]
        %v1878 = vld [vmem:[#allocation11 + $0x38] sm:$0xf]
        %v1879 = vld [vmem:[#allocation11 + $0x3c] sm:$0xf]
        %v1880 = vld [vmem:[#allocation11 + $0x40] sm:$0xf]
        %v1881 = vld [vmem:[#allocation11 + $0x44] sm:$0xf]
        %v1882 = vld [vmem:[#allocation11 + $0x48] sm:$0xf]
        %v1883 = vld [vmem:[#allocation11 + $0x4c] sm:$0xf]
        %v1884 = vld [vmem:[#allocation11 + $0x50] sm:$0xf]
        %v1885 = vld [vmem:[#allocation11 + $0x54] sm:$0xf]
        %v1886 = vld [vmem:[#allocation11 + $0x58] sm:$0xf]
        %v1887 = vld [vmem:[#allocation11 + $0x5c] sm:$0xf]
        %v1888 = vld [vmem:[#allocation11 + $0x60] sm:$0xf]
        %v1889 = vld [vmem:[#allocation11 + $0x64] sm:$0xf]
        %v1890 = vld [vmem:[#allocation11 + $0x68] sm:$0xf]
        %v1891 = vld [vmem:[#allocation11 + $0x6c] sm:$0xf]
        %v1892 = vld [vmem:[#allocation11 + $0x70] sm:$0xf]
        %v1893 = vld [vmem:[#allocation11 + $0x74] sm:$0xf]
        %v1894 = vld [vmem:[#allocation11 + $0x78] sm:$0xf]
        %v1895 = vld [vmem:[#allocation11 + $0x7c] sm:$0xf]
        %v1896 = vld [vmem:[%s17] sm:$0x1]
        %v1898 = vperm.slane %v1896, 0
        %v1932 = vunpack.c.l.b16 %v1864
        %v1933 = vunpack.c.l.b16 %v1865
        %v1934 = vunpack.c.l.b16 %v1866
        %v1935 = vunpack.c.l.b16 %v1867
        %v1936 = vunpack.c.l.b16 %v1868
        %v1937 = vunpack.c.l.b16 %v1869
        %v1938 = vunpack.c.l.b16 %v1870
        %v1939 = vunpack.c.l.b16 %v1871
        %v1940 = vunpack.c.l.b16 %v1872
        %v1941 = vunpack.c.l.b16 %v1873
        %v1942 = vunpack.c.l.b16 %v1874
        %v1943 = vunpack.c.l.b16 %v1875
        %v1944 = vunpack.c.l.b16 %v1876
        %v1945 = vunpack.c.l.b16 %v1877
        %v1946 = vunpack.c.l.b16 %v1878
        %v1947 = vunpack.c.l.b16 %v1879
        %v1948 = vunpack.c.l.b16 %v1880
        %v1949 = vunpack.c.l.b16 %v1881
        %v1950 = vunpack.c.l.b16 %v1882
        %v1951 = vunpack.c.l.b16 %v1883
        %v1952 = vunpack.c.l.b16 %v1884
        %v1953 = vunpack.c.l.b16 %v1885
        %v1954 = vunpack.c.l.b16 %v1886
        %v1955 = vunpack.c.l.b16 %v1887
        %v1956 = vunpack.c.l.b16 %v1888
        %v1957 = vunpack.c.l.b16 %v1889
        %v1958 = vunpack.c.l.b16 %v1890
        %v1959 = vunpack.c.l.b16 %v1891
        %v1960 = vunpack.c.l.b16 %v1892
        %v1961 = vunpack.c.l.b16 %v1893
        %v1962 = vunpack.c.l.b16 %v1894
        %v1963 = vunpack.c.l.b16 %v1895
        %v1964 = vpack.c.b16 %v1933, %v1932
        %v1965 = vpack.c.b16 %v1935, %v1934
        %v1966 = vpack.c.b16 %v1937, %v1936
        %v1967 = vpack.c.b16 %v1939, %v1938
        %v1968 = vpack.c.b16 %v1941, %v1940
        %v1969 = vpack.c.b16 %v1943, %v1942
        %v1970 = vpack.c.b16 %v1945, %v1944
        %v1971 = vpack.c.b16 %v1947, %v1946
        %v1972 = vpack.c.b16 %v1949, %v1948
        %v1973 = vpack.c.b16 %v1951, %v1950
        %v1974 = vpack.c.b16 %v1953, %v1952
        %v1975 = vpack.c.b16 %v1955, %v1954
        %v1976 = vpack.c.b16 %v1957, %v1956
        %v1977 = vpack.c.b16 %v1959, %v1958
        %v1978 = vpack.c.b16 %v1961, %v1960
        %v1979 = vpack.c.b16 %v1963, %v1962
        %1996 = vmatpush.bf16.msra.mxu0 %v1971
        %1997 = vmatpush.bf16.msra.mxu0 %v1970
        %1998 = vmatpush.bf16.msra.mxu0 %v1969
        %1999 = vmatpush.bf16.msra.mxu0 %v1968
        %2000 = vmatpush.bf16.msra.mxu0 %v1967
        %2001 = vmatpush.bf16.msra.mxu0 %v1966
        %2002 = vmatpush.bf16.msra.mxu0 %v1965
        %2003 = vmatpush.bf16.msra.mxu0 %v1964
        %2004 = vmatmul.bf16.gmra.mxu0 %v1862
        %v2005 = vpop.f32.mrf.mxu0
        %v2006 = vadd.f32 %v1898, %v2005
        %v2007 = vpop.f32.mrf.mxu0
        %2008 = vdwg.mxu0
        %2009 = vmatpush.bf16.msra.mxu0 %v1979
        %2010 = vmatpush.bf16.msra.mxu0 %v1978
        %2011 = vmatpush.bf16.msra.mxu0 %v1977
        %2012 = vmatpush.bf16.msra.mxu0 %v1976
        %2013 = vmatpush.bf16.msra.mxu0 %v1975
        %2014 = vmatpush.bf16.msra.mxu0 %v1974
        %2015 = vmatpush.bf16.msra.mxu0 %v1973
        %2016 = vmatpush.bf16.msra.mxu0 %v1972
        %2017 = vmatmul.bf16.gmra.mxu0 %v1863
        %v2018 = vpop.f32.mrf.mxu0
        %v2019 = vadd.f32 %v2006, %v2018
        %v2020 = vpop.f32.mrf.mxu0
        %2021 = vdwg.mxu0
        %2022 = vst [vmem:[%s690] sm:$0xff] %v2019
        %s2023 = sand.u32 %s434, 1
        %s2024 = scalar_lea.sflag [#allocation4], %s2023
        %s2025 = sand.u32 %s434, 1
        %s2026 = smul.addr %s2025, 8
        %s2027 = scalar_lea.vmem [#allocation13], %s2026
        // Predicated region
        $region117: #{tpu_custom_call.1} parent=91 // pred_check
          %p2028 = pneg %p444
        $region118: #{tpu_custom_call.1} parent=91 // pred_check_branch
          %2030 = sbr.rel (%p2028) target = $region120
        $region119: #{tpu_custom_call.1} parent=91 // pred_region
          %2032 = vsyncadd %s2024, 0
          %s2033 = smul.addr %s38, 8
          %s2034 = scalar_lea.hbm %s18, %s2033
          %s2036 = sshll.u32 %s2027, 4
          %s2037 = int_to_ptr.vmem [resolvable:$true] %s2036
          %s2038 = sshll.u32 %s2034, 4
          %s2039 = int_to_ptr.hbm [resolvable:$true] %s2038
          %2041 = dma.vmem_to_hbm [thread:$0]  %s2037, 128, %s2039, %s2024
        $region120: #{tpu_custom_call.1} parent=91 // pred_fallthru
          _
      $region92: #{tpu_custom_call.1} parent=5 // pred_fallthru
        _
      %p2042 = scmp.le.s32.totalorder 2, %s33
      // Predicated region
      $region121: #{tpu_custom_call.1} parent=5 // pred_check
        %p2043 = pneg %p2042
      $region122: #{tpu_custom_call.1} parent=5 // pred_check_branch
        %2045 = sbr.rel (%p2043) target = $region124
      $region123: #{tpu_custom_call.1} parent=5 // pred_region
        %s2046 = ssub.s32 %s33, 2
        // Predicated region
        $region125: #{tpu_custom_call.1} parent=123 // pred_check
          %p2047 = pneg %p450
        $region126: #{tpu_custom_call.1} parent=123 // pred_check_branch
          %2049 = sbr.rel (%p2047) target = $region128
        $region127: #{tpu_custom_call.1} parent=123 // pred_region
          %s2050 = sand.u32 %s435, 1
          %s2051 = scalar_lea.sflag [#allocation4], %s2050
          %s2052 = sand.u32 %s435, 1
          %s2053 = smul.addr %s2052, 8
          %s2054 = scalar_lea.vmem [#allocation13], %s2053
          %2056 = dma.done %s2051, 128
        $region128: #{tpu_custom_call.1} parent=123 // pred_fallthru
          _
      $region124: #{tpu_custom_call.1} parent=5 // pred_fallthru
        _
    $region6: #{tpu_custom_call.1} parent=1 // loop_footer
      %s37 = sadd.s32 1, %s33
    $region7: #{tpu_custom_call.1} parent=1 // loop_footer_branch
      %32 = sbr.rel target = $region3
    $region8: #{tpu_custom_call.1} parent=1 // loop_exit
      _
    %2057 = vsyncpa [#allocation3], 1
    %s2058 = scalar_lea.sflag [#allocation3], 1
    %2059 = vsyncpa %s2058, 1
    %2060 = vsyncpa [#allocation6], 1
    %2061 = vsyncpa [#allocation9], 1
    %2062 = vsyncpa [#allocation12], 1
    %2063 = vsyncpa [#allocation4], 1
    %s2064 = scalar_lea.sflag [#allocation4], 1
    %2065 = vsyncpa %s2064, 1

</llo_original>
